<compile_context>
chip_gen: v5e
topology: v5e:2x2
jax: 0.10.0
libtpu: 0.0.40
codegen_flags: <defaults>
</compile_context>

<pallas_src>
import math
import functools

import jax
import jax.numpy as jnp
from jax.experimental import pallas as pl
from jax.experimental.pallas import tpu as pltpu

LN_EPS = 1e-5   # PyTorch nn.LayerNorm default
LANES = 128


def _round_up(n, m):
    return ((n + m - 1) // m) * m


def _nbytes(a):
    return int(a.size) * a.dtype.itemsize


def _vmem_limit_bytes(frac=0.8, fallback=48 * 1024 * 1024):
    """~80% of physical VMEM (v5e/v6e: ~102 MiB, v7x: ~51 MiB)."""
    try:
        info = pltpu.get_tpu_info()
        cap = getattr(info, "vmem_capacity_bytes", None)
        if cap:
            return int(cap * frac)
    except Exception:
        pass
    return fallback


def _default_batch_tile(B, S, E):
    """Prefer >=2 parallel batch tiles (v7x has 2 TensorCores) while keeping
    the resident f32 activation scratch modest."""
    bt = B // 2 if (B >= 2 and B % 2 == 0) else B
    while bt > 1 and bt % 2 == 0 and bt * S * E * 4 > 8 * 1024 * 1024:
        bt //= 2
    return max(bt, 1)


# -----------------------------------------------------------------------------
# Single fused kernel: grid = (batch_tiles, num_blocks).
# Activation (Bt*S, E) lives in a VMEM scratch across the block axis.
# -----------------------------------------------------------------------------
def transformer_stack_kernel(
    x_ref,        # (Bt, S, E) bf16   input activations (read only at block 0)
    wqkv_ref,     # (E, QKVp) or (L, E, QKVp)   fused [Wq | Wk | Wv], lane-padded
    wo_ref,       # (E, E)    or (L, E, E)
    ln1_g_ref,    # (1, E)    or (L, 1, E)
    ln1_b_ref,
    w1_ref,       # (E, F)    or (L, E, F)
    b1_ref,       # (1, F)    or (L, 1, F)
    w2_ref,       # (F, E)    or (L, F, E)
    b2_ref,       # (1, E)    or (L, 1, E)
    ln2_g_ref,
    ln2_b_ref,
    wc_ref,       # (E, Cp)   classifier weight, lane-padded
    bc_ref,       # (1, Cp)
    o_ref,        # (Bt, Cp)  padded logits (written only at last block)
    act_ref,      # VMEM scratch (Bt*S, E) f32 — activation carried across blocks
    attn_ref,     # VMEM scratch (Bt*S, E) f32 — per-head outputs (no concat)
    *,
    num_heads: int,
    seq_len: int,
    embed_dim: int,
    weights_resident: bool,
):
    l = pl.program_id(1)
    n_blocks = pl.num_programs(1)

    H = num_heads
    E = embed_dim
    S = seq_len
    d_k = E // H
    Bt = x_ref.shape[0]
    rows = Bt * S
    inv_sqrt_dk = 1.0 / math.sqrt(d_k)
    cdt = wqkv_ref.dtype   # MXU operand dtype (bf16)

    # Per-block parameter views. When weights are VMEM-resident the whole stack
    # is one block (DMA'd once) and we index the leading L axis dynamically.
    def blk(ref):
        return ref[l] if weights_resident else ref[...]

    wqkv = blk(wqkv_ref)
    wo = blk(wo_ref)
    ln1_g, ln1_b = blk(ln1_g_ref), blk(ln1_b_ref)
    w1, b1 = blk(w1_ref), blk(b1_ref)
    w2, b2 = blk(w2_ref), blk(b2_ref)
    ln2_g, ln2_b = blk(ln2_g_ref), blk(ln2_b_ref)

    # Load the (bf16-DMA'd) input activation into the resident f32 scratch.
    @pl.when(l == 0)
    def _():
        act_ref[...] = x_ref[...].reshape(rows, E).astype(jnp.float32)

    x = act_ref[...]               # (rows, E) f32
    xm = x.astype(cdt)

    # --- fused QKV projection: one full-width MXU matmul ------------------
    qkv = jnp.dot(xm, wqkv, preferred_element_type=jnp.float32)   # (rows, QKVp)

    # --- per-head attention: 3-D einsums (single batch dim), outputs written
    # --- straight into attn_ref at their lane offsets (no list / concat) ---
    for h in range(H):                         # static python loop, H small
        qh = qkv[:, h * d_k:(h + 1) * d_k].reshape(Bt, S, d_k).astype(cdt)
        kh = qkv[:, E + h * d_k: E + (h + 1) * d_k].reshape(Bt, S, d_k).astype(cdt)
        vh = qkv[:, 2 * E + h * d_k: 2 * E + (h + 1) * d_k].reshape(Bt, S, d_k).astype(cdt)

        s = jnp.einsum("bqd,bkd->bqk", qh, kh,
                       preferred_element_type=jnp.float32) * inv_sqrt_dk
        s = s - jnp.max(s, axis=-1, keepdims=True)
        p = jnp.exp(s)
        p = p * pl.reciprocal(jnp.sum(p, axis=-1, keepdims=True), approx=True)

        ho = jnp.einsum("bqk,bkd->bqd", p.astype(cdt), vh,
                        preferred_element_type=jnp.float32)        # (Bt, S, d_k)
        attn_ref[:, h * d_k:(h + 1) * d_k] = ho.reshape(rows, d_k)

    # single (rows, E) @ (E, E) output projection over the concatenated heads
    attn = jnp.dot(attn_ref[...].astype(cdt), wo,
                   preferred_element_type=jnp.float32)              # (rows, E)

    # --- residual + LayerNorm 1 (f32) --------------------------------------
    y = attn + x
    mu = jnp.mean(y, axis=-1, keepdims=True)
    var = jnp.mean((y - mu) ** 2, axis=-1, keepdims=True)
    y = (y - mu) * jax.lax.rsqrt(var + LN_EPS) * ln1_g + ln1_b

    # --- feed-forward: relu(linear_1) -> linear_2 (FeedForwardBase) ---------
    h1 = jnp.dot(y.astype(cdt), w1, preferred_element_type=jnp.float32) + b1
    h1 = jnp.maximum(h1, 0.0)
    ff = jnp.dot(h1.astype(cdt), w2, preferred_element_type=jnp.float32) + b2

    # --- residual + LayerNorm 2 ---------------------------------------------
    z = ff + y
    mu2 = jnp.mean(z, axis=-1, keepdims=True)
    var2 = jnp.mean((z - mu2) ** 2, axis=-1, keepdims=True)
    z = (z - mu2) * jax.lax.rsqrt(var2 + LN_EPS) * ln2_g + ln2_b

    # keep activation resident for the next block
    act_ref[...] = z

    # --- epilogue: mean-pool over seq + classifier (lane-dense output) ------
    @pl.when(l == n_blocks - 1)
    def _():
        pooled = jnp.mean(z.reshape(Bt, S, E), axis=1)              # (Bt, E)
        logits = jnp.dot(pooled.astype(cdt), wc_ref[...],
                         preferred_element_type=jnp.float32) + bc_ref[...]
        o_ref[...] = logits.astype(o_ref.dtype)


def fused_text_classifier(x, params, *, num_heads, batch_tile=None,
                          resident_weights=None):
    """x: (B, S, E) activations (any float dtype; DMA'd as given). Returns
    (B, num_out) f32 logits."""
    B, S, E = x.shape
    L, _, QKVp = params["wqkv"].shape
    F = params["w1"].shape[-1]
    Cp = params["wc_pad"].shape[-1]
    H = num_heads

    Bt = _default_batch_tile(B, S, E) if batch_tile is None else batch_tile
    assert B % Bt == 0, "batch must be divisible by batch_tile"
    n_bt = B // Bt
    rows = Bt * S

    vmem_limit = _vmem_limit_bytes()

    stacked = [params[k] for k in ("wqkv", "wo", "ln1_g", "ln1_b", "w1", "b1",
                                   "w2", "b2", "ln2_g", "ln2_b")]
    weight_bytes = sum(_nbytes(a) for a in stacked) + \
        _nbytes(params["wc_pad"]) + _nbytes(params["bc_pad"])
    scratch_bytes = 2 * rows * E * 4                       # act + attn scratch
    io_bytes = 2 * Bt * S * E * x.dtype.itemsize + 2 * Bt * Cp * 4
    if resident_weights is None:
        # keep room for double buffering + compiler scratch
        resident_weights = (2 * weight_bytes + scratch_bytes + io_bytes) \
            <= (3 * vmem_limit) // 4

    kernel = functools.partial(
        transformer_stack_kernel, num_heads=H, seq_len=S, embed_dim=E,
        weights_resident=resident_weights)

    if resident_weights:
        # whole stacked weight as ONE block: DMA'd from HBM once, ever.
        def per_block(shape):
            full = (L,) + shape
            return pl.BlockSpec(full, lambda bt, l, _n=len(full): (0,) * _n)
    else:
        # streamed per block (double-buffered), squeeze the leading L axis.
        def per_block(shape):
            return pl.BlockSpec((None,) + shape,
                                lambda bt, l, _n=len(shape): (l,) + (0,) * _n)

    def const2(shape):               # block-independent 2-D params
        return pl.BlockSpec(shape, lambda bt, l: (0, 0))

    # Advisory cost estimate so XLA schedules the gather / final slice nicely.
    flops_block_tile = rows * (2 * E * (3 * E) + 4 * S * E + 2 * E * E + 4 * E * F)
    flops = n_bt * L * flops_block_tile + 2 * B * E * Cp
    transc = B * L * H * S * S
    bytes_acc = (_nbytes(x) + weight_bytes * (1 if resident_weights else n_bt)
                 + B * Cp * 4)

    logits_pad = pl.pallas_call(
        kernel,
        # 3-D output so block minor dims always equal the full array dims.
        out_shape=jax.ShapeDtypeStruct((n_bt, Bt, Cp), jnp.float32),
        grid=(n_bt, L),              # batch tiles outer (parallel), blocks inner
        in_specs=[
            pl.BlockSpec((Bt, S, E), lambda bt, l: (bt, 0, 0)),   # x (bf16 DMA)
            per_block((E, QKVp)),    # wqkv
            per_block((E, E)),       # wo
            per_block((1, E)),       # ln1_g
            per_block((1, E)),       # ln1_b
            per_block((E, F)),       # w1
            per_block((1, F)),       # b1
            per_block((F, E)),       # w2
            per_block((1, E)),       # b2
            per_block((1, E)),       # ln2_g
            per_block((1, E)),       # ln2_b
            const2((E, Cp)),         # wc (padded to 128 lanes)
            const2((1, Cp)),         # bc (padded)
        ],
        out_specs=pl.BlockSpec((None, Bt, Cp), lambda bt, l: (bt, 0, 0)),
        scratch_shapes=[pltpu.VMEM((rows, E), jnp.float32),   # resident activation
                        pltpu.VMEM((rows, E), jnp.float32)],  # head outputs
        compiler_params=pltpu.CompilerParams(
            dimension_semantics=("parallel", "arbitrary"),
            vmem_limit_bytes=vmem_limit,
        ),
        cost_estimate=pl.CostEstimate(flops=int(flops),
                                      transcendentals=int(transc),
                                      bytes_accessed=int(bytes_acc)),
    )(
        x,
        params["wqkv"], params["wo"],
        params["ln1_g"], params["ln1_b"],
        params["w1"], params["b1"], params["w2"], params["b2"],
        params["ln2_g"], params["ln2_b"],
        params["wc_pad"], params["bc_pad"],
    )
    return logits_pad.reshape(B, Cp)[:, : params["num_out"]]


# -----------------------------------------------------------------------------
# Parameter construction (deterministic, synthetic) and forward pass.
# -----------------------------------------------------------------------------
def positional_encoding_table(max_seq_len, embed_dim):
    pos = jnp.arange(max_seq_len, dtype=jnp.float32)[:, None]
    idx = jnp.arange(embed_dim, dtype=jnp.float32)[None, :]
    angle = pos / jnp.power(10000.0, 2.0 * idx / embed_dim)
    even = (jnp.arange(embed_dim)[None, :] % 2) == 0
    return jnp.where(even, jnp.sin(angle), jnp.cos(angle))  # (max_seq_len, E)


def init_params(key, *, embed_dim, num_heads, num_blocks, num_classes,
                vocab_size, ffn_dim, max_seq_len=512,
                compute_dtype=jnp.bfloat16):
    E, F, L = embed_dim, ffn_dim, num_blocks
    qkvp = _round_up(3 * E, LANES)
    out_dim = num_classes if num_classes > 2 else 1
    cp = _round_up(out_dim, LANES)

    keys = jax.random.split(key, 3 + num_blocks)

    def uni(k, shape, fan_in):
        bound = 1.0 / math.sqrt(fan_in)
        return jax.random.uniform(k, shape, jnp.float32, -bound, bound)

    wqkv, wo, w1, b1, w2, b2 = [], [], [], [], [], []
    for i in range(num_blocks):
        ks = jax.random.split(keys[3 + i], 8)
        # (in, out) projections; fused QKV column-padded to a multiple of 128.
        wq = uni(ks[0], (E, E), E)
        wk = uni(ks[1], (E, E), E)
        wv = uni(ks[2], (E, E), E)
        fused = jnp.concatenate([wq, wk, wv], axis=1)           # (E, 3E)
        wqkv.append(jnp.pad(fused, ((0, 0), (0, qkvp - 3 * E))))
        wo.append(uni(ks[3], (E, E), E))
        w1.append(uni(ks[4], (E, F), E))
        b1.append(uni(ks[5], (1, F), E))
        w2.append(uni(ks[6], (F, E), F))
        b2.append(uni(ks[7], (1, E), F))

    wc = uni(keys[1], (E, out_dim), E)
    bc = uni(keys[2], (1, out_dim), E)

    return {
        "embedding": jax.random.normal(keys[0], (vocab_size, E), jnp.float32),
        "pe": positional_encoding_table(max_seq_len, E),
        # MXU operands stored in bf16 (f32 accumulation inside the kernel).
        "wqkv": jnp.stack(wqkv).astype(compute_dtype),   # (L, E, qkvp)
        "wo": jnp.stack(wo).astype(compute_dtype),       # (L, E, E)
        "w1": jnp.stack(w1).astype(compute_dtype),       # (L, E, F)
        "w2": jnp.stack(w2).astype(compute_dtype),       # (L, F, E)
        # Elementwise parameters stay f32 (v5e has no bf16 VPU).
        "b1": jnp.stack(b1),                             # (L, 1, F)
        "b2": jnp.stack(b2),                             # (L, 1, E)
        "ln1_g": jnp.ones((L, 1, E), jnp.float32),
        "ln1_b": jnp.zeros((L, 1, E), jnp.float32),
        "ln2_g": jnp.ones((L, 1, E), jnp.float32),
        "ln2_b": jnp.zeros((L, 1, E), jnp.float32),
        "wc_pad": jnp.pad(wc, ((0, 0), (0, cp - out_dim))).astype(compute_dtype),
        "bc_pad": jnp.pad(bc, ((0, 0), (0, cp - out_dim))),
        "num_out": out_dim,
        "compute_dtype": compute_dtype,
    }


def text_classifier_forward(token_ids, params, num_heads, batch_tile=None):
    # token embedding (gather) + positional encoding: cheap glue in plain JAX.
    emb = params["embedding"][token_ids]                  # (B, S, E)
    B, S, E = emb.shape
    x = emb * math.sqrt(E) + params["pe"][None, :S, :]
    # bf16 input DMA (f32 resident copy is rebuilt inside the kernel).
    x = x.astype(params["compute_dtype"])
    # dropout layers are identity in eval mode.
    return fused_text_classifier(x, params, num_heads=num_heads,
                                 batch_tile=batch_tile)   # (B, num_classes)


if __name__ == "__main__":
    embed_dim = 32
    num_heads = 2
    num_blocks = 2
    num_classes = 3
    vocab_size = 50
    ffn_dim = 32
    batch, seq_len = 2, 8

    key = jax.random.PRNGKey(0)
    pkey, dkey = jax.random.split(key)
    params = init_params(
        pkey,
        embed_dim=embed_dim,
        num_heads=num_heads,
        num_blocks=num_blocks,
        num_classes=num_classes,
        vocab_size=vocab_size,
        ffn_dim=ffn_dim,
    )
    token_ids = jax.random.randint(dkey, (batch, seq_len), 0, vocab_size, jnp.int32)

    logits = text_classifier_forward(token_ids, params, num_heads)
    jax.block_until_ready(logits)
    assert logits.shape == (batch, num_classes)
    print("KERNEL_OK")
</pallas_src>

<mosaic_0001>
module attributes {stable_mosaic.version = 11 : i64} {
  func.func @transformer_stack_kernel(%arg0: i32, %arg1: i32, %arg2: memref<1x8x32xbf16, #tpu.memory_space<vmem>>, %arg3: memref<2x32x128xbf16, #tpu.memory_space<vmem>>, %arg4: memref<2x32x32xbf16, #tpu.memory_space<vmem>>, %arg5: memref<2x1x32xf32, #tpu.memory_space<vmem>>, %arg6: memref<2x1x32xf32, #tpu.memory_space<vmem>>, %arg7: memref<2x32x32xbf16, #tpu.memory_space<vmem>>, %arg8: memref<2x1x32xf32, #tpu.memory_space<vmem>>, %arg9: memref<2x32x32xbf16, #tpu.memory_space<vmem>>, %arg10: memref<2x1x32xf32, #tpu.memory_space<vmem>>, %arg11: memref<2x1x32xf32, #tpu.memory_space<vmem>>, %arg12: memref<2x1x32xf32, #tpu.memory_space<vmem>>, %arg13: memref<32x128xbf16, #tpu.memory_space<vmem>>, %arg14: memref<1x128xf32, #tpu.memory_space<vmem>>, %arg15: memref<1x1x128xf32, #tpu.memory_space<vmem>>, %arg16: memref<8x32xf32, #tpu.memory_space<vmem>>, %arg17: memref<8x32xf32, #tpu.memory_space<vmem>>) attributes {dimension_semantics = [#tpu.dimension_semantics<parallel>, #tpu.dimension_semantics<arbitrary>], iteration_bounds = array<i64: 2, 2>, scalar_prefetch = 0 : i64, scratch_operands = 2 : i64, tpu.core_type = #tpu.core_type<tc>, window_params = [{transform_indices = @transform_0, window_bounds = array<i64: 1, 8, 32>}, {pipeline_mode = #tpu.pipeline_mode<synchronous>, transform_indices = @transform_1, window_bounds = array<i64: 2, 32, 128>}, {pipeline_mode = #tpu.pipeline_mode<synchronous>, transform_indices = @transform_2, window_bounds = array<i64: 2, 32, 32>}, {pipeline_mode = #tpu.pipeline_mode<synchronous>, transform_indices = @transform_3, window_bounds = array<i64: 2, 1, 32>}, {pipeline_mode = #tpu.pipeline_mode<synchronous>, transform_indices = @transform_4, window_bounds = array<i64: 2, 1, 32>}, {pipeline_mode = #tpu.pipeline_mode<synchronous>, transform_indices = @transform_5, window_bounds = array<i64: 2, 32, 32>}, {pipeline_mode = #tpu.pipeline_mode<synchronous>, transform_indices = @transform_6, window_bounds = array<i64: 2, 1, 32>}, {pipeline_mode = #tpu.pipeline_mode<synchronous>, transform_indices = @transform_7, window_bounds = array<i64: 2, 32, 32>}, {pipeline_mode = #tpu.pipeline_mode<synchronous>, transform_indices = @transform_8, window_bounds = array<i64: 2, 1, 32>}, {pipeline_mode = #tpu.pipeline_mode<synchronous>, transform_indices = @transform_9, window_bounds = array<i64: 2, 1, 32>}, {pipeline_mode = #tpu.pipeline_mode<synchronous>, transform_indices = @transform_10, window_bounds = array<i64: 2, 1, 32>}, {pipeline_mode = #tpu.pipeline_mode<synchronous>, transform_indices = @transform_11, window_bounds = array<i64: 32, 128>}, {pipeline_mode = #tpu.pipeline_mode<synchronous>, transform_indices = @transform_12, window_bounds = array<i64: 1, 128>}, {transform_indices = @transform_13, window_bounds = array<i64: 1, 1, 128>}]} {
    %0 = arith.index_cast %arg1 : i32 to index
    %c0 = arith.constant 0 : index
    %c0_0 = arith.constant 0 : index
    %1 = vector.load %arg3[%0, %c0, %c0_0] : memref<2x32x128xbf16, #tpu.memory_space<vmem>>, vector<1x32x128xbf16>
    %2 = vector.shape_cast %1 : vector<1x32x128xbf16> to vector<32x128xbf16>
    %3 = arith.index_cast %arg1 : i32 to index
    %c0_1 = arith.constant 0 : index
    %c0_2 = arith.constant 0 : index
    %4 = vector.load %arg4[%3, %c0_1, %c0_2] : memref<2x32x32xbf16, #tpu.memory_space<vmem>>, vector<1x32x32xbf16>
    %5 = vector.shape_cast %4 : vector<1x32x32xbf16> to vector<32x32xbf16>
    %6 = arith.index_cast %arg1 : i32 to index
    %c0_3 = arith.constant 0 : index
    %c0_4 = arith.constant 0 : index
    %7 = vector.load %arg5[%6, %c0_3, %c0_4] : memref<2x1x32xf32, #tpu.memory_space<vmem>>, vector<1x1x32xf32>
    %8 = vector.shape_cast %7 : vector<1x1x32xf32> to vector<1x32xf32>
    %9 = arith.index_cast %arg1 : i32 to index
    %c0_5 = arith.constant 0 : index
    %c0_6 = arith.constant 0 : index
    %10 = vector.load %arg6[%9, %c0_5, %c0_6] : memref<2x1x32xf32, #tpu.memory_space<vmem>>, vector<1x1x32xf32>
    %11 = vector.shape_cast %10 : vector<1x1x32xf32> to vector<1x32xf32>
    %12 = arith.index_cast %arg1 : i32 to index
    %c0_7 = arith.constant 0 : index
    %c0_8 = arith.constant 0 : index
    %13 = vector.load %arg7[%12, %c0_7, %c0_8] : memref<2x32x32xbf16, #tpu.memory_space<vmem>>, vector<1x32x32xbf16>
    %14 = vector.shape_cast %13 : vector<1x32x32xbf16> to vector<32x32xbf16>
    %15 = arith.index_cast %arg1 : i32 to index
    %c0_9 = arith.constant 0 : index
    %c0_10 = arith.constant 0 : index
    %16 = vector.load %arg8[%15, %c0_9, %c0_10] : memref<2x1x32xf32, #tpu.memory_space<vmem>>, vector<1x1x32xf32>
    %17 = vector.shape_cast %16 : vector<1x1x32xf32> to vector<1x32xf32>
    %18 = arith.index_cast %arg1 : i32 to index
    %c0_11 = arith.constant 0 : index
    %c0_12 = arith.constant 0 : index
    %19 = vector.load %arg9[%18, %c0_11, %c0_12] : memref<2x32x32xbf16, #tpu.memory_space<vmem>>, vector<1x32x32xbf16>
    %20 = vector.shape_cast %19 : vector<1x32x32xbf16> to vector<32x32xbf16>
    %21 = arith.index_cast %arg1 : i32 to index
    %c0_13 = arith.constant 0 : index
    %c0_14 = arith.constant 0 : index
    %22 = vector.load %arg10[%21, %c0_13, %c0_14] : memref<2x1x32xf32, #tpu.memory_space<vmem>>, vector<1x1x32xf32>
    %23 = vector.shape_cast %22 : vector<1x1x32xf32> to vector<1x32xf32>
    %24 = arith.index_cast %arg1 : i32 to index
    %c0_15 = arith.constant 0 : index
    %c0_16 = arith.constant 0 : index
    %25 = vector.load %arg11[%24, %c0_15, %c0_16] : memref<2x1x32xf32, #tpu.memory_space<vmem>>, vector<1x1x32xf32>
    %26 = vector.shape_cast %25 : vector<1x1x32xf32> to vector<1x32xf32>
    %27 = arith.index_cast %arg1 : i32 to index
    %c0_17 = arith.constant 0 : index
    %c0_18 = arith.constant 0 : index
    %28 = vector.load %arg12[%27, %c0_17, %c0_18] : memref<2x1x32xf32, #tpu.memory_space<vmem>>, vector<1x1x32xf32>
    %29 = vector.shape_cast %28 : vector<1x1x32xf32> to vector<1x32xf32>
    %c0_i32 = arith.constant 0 : i32
    %30 = arith.cmpi eq, %arg1, %c0_i32 : i32
    %31 = arith.extui %30 : i1 to i32
    %c0_i32_19 = arith.constant 0 : i32
    %32 = arith.cmpi ne, %31, %c0_i32_19 : i32
    scf.if %32 {
      %c0_54 = arith.constant 0 : index
      %c0_55 = arith.constant 0 : index
      %c0_56 = arith.constant 0 : index
      %151 = vector.load %arg2[%c0_54, %c0_55, %c0_56] : memref<1x8x32xbf16, #tpu.memory_space<vmem>>, vector<1x8x32xbf16>
      %152 = vector.shape_cast %151 : vector<1x8x32xbf16> to vector<8x32xbf16>
      %153 = arith.extf %152 : vector<8x32xbf16> to vector<8x32xf32>
      %c0_57 = arith.constant 0 : index
      %c0_58 = arith.constant 0 : index
      %154 = vector.load %arg16[%c0_57, %c0_58] : memref<8x32xf32, #tpu.memory_space<vmem>>, vector<8x32xf32>
      tpu.vector_store %arg16[%c0_57, %c0_58], %153 {strides = array<i32>} : memref<8x32xf32, #tpu.memory_space<vmem>>, vector<8x32xf32>,
    } else {
    }
    %c0_20 = arith.constant 0 : index
    %c0_21 = arith.constant 0 : index
    %33 = vector.load %arg16[%c0_20, %c0_21] : memref<8x32xf32, #tpu.memory_space<vmem>>, vector<8x32xf32>
    %34 = arith.truncf %33 : vector<8x32xf32> to vector<8x32xbf16>
    %cst = arith.constant dense<0.000000e+00> : vector<8x128xf32>
    %35 = tpu.matmul %34, %2, %cst {dimension_numbers = #tpu.dot_dimension_numbers<[1], [0], [0], [1], [0, 0, 1, 1], [], []>} : vector<8x32xbf16>, vector<32x128xbf16>, vector<8x128xf32> -> vector<8x128xf32>
    %36 = vector.extract_strided_slice %35 {offsets = [0, 0], sizes = [8, 16], strides = [1, 1]} : vector<8x128xf32> to vector<8x16xf32>
    %37 = vector.shape_cast %36 : vector<8x16xf32> to vector<1x8x16xf32>
    %38 = arith.truncf %37 : vector<1x8x16xf32> to vector<1x8x16xbf16>
    %39 = vector.extract_strided_slice %35 {offsets = [0, 32], sizes = [8, 16], strides = [1, 1]} : vector<8x128xf32> to vector<8x16xf32>
    %40 = vector.shape_cast %39 : vector<8x16xf32> to vector<1x8x16xf32>
    %41 = arith.truncf %40 : vector<1x8x16xf32> to vector<1x8x16xbf16>
    %42 = vector.extract_strided_slice %35 {offsets = [0, 64], sizes = [8, 16], strides = [1, 1]} : vector<8x128xf32> to vector<8x16xf32>
    %43 = vector.shape_cast %42 : vector<8x16xf32> to vector<1x8x16xf32>
    %44 = arith.truncf %43 : vector<1x8x16xf32> to vector<1x8x16xbf16>
    "tpu.trace_start"() <{level = 10 : i32, message = "bqd,bkd->bqk"}> : () -> ()
    %cst_22 = arith.constant dense<0.000000e+00> : vector<1x8x8xf32>
    %45 = tpu.matmul %38, %41, %cst_22 {dimension_numbers = #tpu.dot_dimension_numbers<[2], [2], [1], [1], [0, 0, 0, 1, 1, 1], [0], [0]>} : vector<1x8x16xbf16>, vector<1x8x16xbf16>, vector<1x8x8xf32> -> vector<1x8x8xf32>
    "tpu.trace_stop"() : () -> ()
    %cst_23 = arith.constant 2.500000e-01 : f32
    %46 = vector.broadcast %cst_23 : f32 to vector<1x8x8xf32>
    %47 = arith.mulf %45, %46 : vector<1x8x8xf32>
    %cst_24 = arith.constant dense<0xFF800000> : vector<1x8xf32>
    %48 = vector.multi_reduction <maximumf>, %47, %cst_24 [2] : vector<1x8x8xf32> to vector<1x8xf32>
    %49 = vector.shape_cast %48 : vector<1x8xf32> to vector<1x8x1xf32>
    %50 = vector.broadcast %49 : vector<1x8x1xf32> to vector<1x8x8xf32>
    %51 = arith.subf %47, %50 : vector<1x8x8xf32>
    %52 = math.exp %51 : vector<1x8x8xf32>
    %cst_25 = arith.constant dense<0.000000e+00> : vector<1x8xf32>
    %53 = vector.multi_reduction <add>, %52, %cst_25 [2] : vector<1x8x8xf32> to vector<1x8xf32>
    %54 = vector.shape_cast %53 : vector<1x8xf32> to vector<1x8x1xf32>
    %55 = tpu.reciprocal %54 {approx = true} : vector<1x8x1xf32> -> vector<1x8x1xf32>
    %56 = vector.broadcast %55 : vector<1x8x1xf32> to vector<1x8x8xf32>
    %57 = arith.mulf %52, %56 : vector<1x8x8xf32>
    %58 = arith.truncf %57 : vector<1x8x8xf32> to vector<1x8x8xbf16>
    "tpu.trace_start"() <{level = 10 : i32, message = "bqk,bkd->bqd"}> : () -> ()
    %cst_26 = arith.constant dense<0.000000e+00> : vector<1x8x16xf32>
    %59 = tpu.matmul %58, %44, %cst_26 {dimension_numbers = #tpu.dot_dimension_numbers<[2], [1], [1], [2], [0, 0, 0, 1, 1, 2], [0], [0]>} : vector<1x8x8xbf16>, vector<1x8x16xbf16>, vector<1x8x16xf32> -> vector<1x8x16xf32>
    "tpu.trace_stop"() : () -> ()
    %60 = vector.shape_cast %59 : vector<1x8x16xf32> to vector<8x16xf32>
    %c0_27 = arith.constant 0 : index
    %c0_28 = arith.constant 0 : index
    %61 = vector.load %arg17[%c0_27, %c0_28] : memref<8x32xf32, #tpu.memory_space<vmem>>, vector<8x16xf32>
    tpu.vector_store %arg17[%c0_27, %c0_28], %60 {strides = array<i32>} : memref<8x32xf32, #tpu.memory_space<vmem>>, vector<8x16xf32>,
    %62 = vector.extract_strided_slice %35 {offsets = [0, 16], sizes = [8, 16], strides = [1, 1]} : vector<8x128xf32> to vector<8x16xf32>
    %63 = vector.shape_cast %62 : vector<8x16xf32> to vector<1x8x16xf32>
    %64 = arith.truncf %63 : vector<1x8x16xf32> to vector<1x8x16xbf16>
    %65 = vector.extract_strided_slice %35 {offsets = [0, 48], sizes = [8, 16], strides = [1, 1]} : vector<8x128xf32> to vector<8x16xf32>
    %66 = vector.shape_cast %65 : vector<8x16xf32> to vector<1x8x16xf32>
    %67 = arith.truncf %66 : vector<1x8x16xf32> to vector<1x8x16xbf16>
    %68 = vector.extract_strided_slice %35 {offsets = [0, 80], sizes = [8, 16], strides = [1, 1]} : vector<8x128xf32> to vector<8x16xf32>
    %69 = vector.shape_cast %68 : vector<8x16xf32> to vector<1x8x16xf32>
    %70 = arith.truncf %69 : vector<1x8x16xf32> to vector<1x8x16xbf16>
    "tpu.trace_start"() <{level = 10 : i32, message = "bqd,bkd->bqk"}> : () -> ()
    %cst_29 = arith.constant dense<0.000000e+00> : vector<1x8x8xf32>
    %71 = tpu.matmul %64, %67, %cst_29 {dimension_numbers = #tpu.dot_dimension_numbers<[2], [2], [1], [1], [0, 0, 0, 1, 1, 1], [0], [0]>} : vector<1x8x16xbf16>, vector<1x8x16xbf16>, vector<1x8x8xf32> -> vector<1x8x8xf32>
    "tpu.trace_stop"() : () -> ()
    %cst_30 = arith.constant 2.500000e-01 : f32
    %72 = vector.broadcast %cst_30 : f32 to vector<1x8x8xf32>
    %73 = arith.mulf %71, %72 : vector<1x8x8xf32>
    %cst_31 = arith.constant dense<0xFF800000> : vector<1x8xf32>
    %74 = vector.multi_reduction <maximumf>, %73, %cst_31 [2] : vector<1x8x8xf32> to vector<1x8xf32>
    %75 = vector.shape_cast %74 : vector<1x8xf32> to vector<1x8x1xf32>
    %76 = vector.broadcast %75 : vector<1x8x1xf32> to vector<1x8x8xf32>
    %77 = arith.subf %73, %76 : vector<1x8x8xf32>
    %78 = math.exp %77 : vector<1x8x8xf32>
    %cst_32 = arith.constant dense<0.000000e+00> : vector<1x8xf32>
    %79 = vector.multi_reduction <add>, %78, %cst_32 [2] : vector<1x8x8xf32> to vector<1x8xf32>
    %80 = vector.shape_cast %79 : vector<1x8xf32> to vector<1x8x1xf32>
    %81 = tpu.reciprocal %80 {approx = true} : vector<1x8x1xf32> -> vector<1x8x1xf32>
    %82 = vector.broadcast %81 : vector<1x8x1xf32> to vector<1x8x8xf32>
    %83 = arith.mulf %78, %82 : vector<1x8x8xf32>
    %84 = arith.truncf %83 : vector<1x8x8xf32> to vector<1x8x8xbf16>
    "tpu.trace_start"() <{level = 10 : i32, message = "bqk,bkd->bqd"}> : () -> ()
    %cst_33 = arith.constant dense<0.000000e+00> : vector<1x8x16xf32>
    %85 = tpu.matmul %84, %70, %cst_33 {dimension_numbers = #tpu.dot_dimension_numbers<[2], [1], [1], [2], [0, 0, 0, 1, 1, 2], [0], [0]>} : vector<1x8x8xbf16>, vector<1x8x16xbf16>, vector<1x8x16xf32> -> vector<1x8x16xf32>
    "tpu.trace_stop"() : () -> ()
    %86 = vector.shape_cast %85 : vector<1x8x16xf32> to vector<8x16xf32>
    %c0_34 = arith.constant 0 : index
    %c16 = arith.constant 16 : index
    %87 = vector.load %arg17[%c0_34, %c16] : memref<8x32xf32, #tpu.memory_space<vmem>>, vector<8x16xf32>
    tpu.vector_store %arg17[%c0_34, %c16], %86 {strides = array<i32>} : memref<8x32xf32, #tpu.memory_space<vmem>>, vector<8x16xf32>,
    %c0_35 = arith.constant 0 : index
    %c0_36 = arith.constant 0 : index
    %88 = vector.load %arg17[%c0_35, %c0_36] : memref<8x32xf32, #tpu.memory_space<vmem>>, vector<8x32xf32>
    %89 = arith.truncf %88 : vector<8x32xf32> to vector<8x32xbf16>
    %cst_37 = arith.constant dense<0.000000e+00> : vector<8x32xf32>
    %90 = tpu.matmul %89, %5, %cst_37 {dimension_numbers = #tpu.dot_dimension_numbers<[1], [0], [0], [1], [0, 0, 1, 1], [], []>} : vector<8x32xbf16>, vector<32x32xbf16>, vector<8x32xf32> -> vector<8x32xf32>
    %91 = arith.addf %90, %33 : vector<8x32xf32>
    %cst_38 = arith.constant dense<0.000000e+00> : vector<8xf32>
    %92 = vector.multi_reduction <add>, %91, %cst_38 [1] : vector<8x32xf32> to vector<8xf32>
    %93 = vector.shape_cast %92 : vector<8xf32> to vector<8x1xf32>
    %cst_39 = arith.constant 3.200000e+01 : f32
    %94 = vector.broadcast %cst_39 : f32 to vector<8x1xf32>
    %95 = arith.divf %93, %94 : vector<8x1xf32>
    %96 = vector.broadcast %95 : vector<8x1xf32> to vector<8x32xf32>
    %97 = arith.subf %91, %96 : vector<8x32xf32>
    %98 = arith.mulf %97, %97 : vector<8x32xf32>
    %cst_40 = arith.constant dense<0.000000e+00> : vector<8xf32>
    %99 = vector.multi_reduction <add>, %98, %cst_40 [1] : vector<8x32xf32> to vector<8xf32>
    %100 = vector.shape_cast %99 : vector<8xf32> to vector<8x1xf32>
    %cst_41 = arith.constant 3.200000e+01 : f32
    %101 = vector.broadcast %cst_41 : f32 to vector<8x1xf32>
    %102 = arith.divf %100, %101 : vector<8x1xf32>
    %103 = vector.broadcast %95 : vector<8x1xf32> to vector<8x32xf32>
    %104 = arith.subf %91, %103 : vector<8x32xf32>
    %cst_42 = arith.constant 9.99999974E-6 : f32
    %105 = vector.broadcast %cst_42 : f32 to vector<8x1xf32>
    %106 = arith.addf %102, %105 : vector<8x1xf32>
    %107 = math.rsqrt %106 : vector<8x1xf32>
    %108 = vector.broadcast %107 : vector<8x1xf32> to vector<8x32xf32>
    %109 = arith.mulf %104, %108 : vector<8x32xf32>
    %110 = vector.broadcast %8 : vector<1x32xf32> to vector<8x32xf32>
    %111 = arith.mulf %109, %110 : vector<8x32xf32>
    %112 = vector.broadcast %11 : vector<1x32xf32> to vector<8x32xf32>
    %113 = arith.addf %111, %112 : vector<8x32xf32>
    %114 = arith.truncf %113 : vector<8x32xf32> to vector<8x32xbf16>
    %cst_43 = arith.constant dense<0.000000e+00> : vector<8x32xf32>
    %115 = tpu.matmul %114, %14, %cst_43 {dimension_numbers = #tpu.dot_dimension_numbers<[1], [0], [0], [1], [0, 0, 1, 1], [], []>} : vector<8x32xbf16>, vector<32x32xbf16>, vector<8x32xf32> -> vector<8x32xf32>
    %116 = vector.broadcast %17 : vector<1x32xf32> to vector<8x32xf32>
    %117 = arith.addf %115, %116 : vector<8x32xf32>
    %cst_44 = arith.constant 0.000000e+00 : f32
    %118 = vector.broadcast %cst_44 : f32 to vector<8x32xf32>
    %119 = arith.maximumf %117, %118 : vector<8x32xf32>
    %120 = arith.truncf %119 : vector<8x32xf32> to vector<8x32xbf16>
    %cst_45 = arith.constant dense<0.000000e+00> : vector<8x32xf32>
    %121 = tpu.matmul %120, %20, %cst_45 {dimension_numbers = #tpu.dot_dimension_numbers<[1], [0], [0], [1], [0, 0, 1, 1], [], []>} : vector<8x32xbf16>, vector<32x32xbf16>, vector<8x32xf32> -> vector<8x32xf32>
    %122 = vector.broadcast %23 : vector<1x32xf32> to vector<8x32xf32>
    %123 = arith.addf %121, %122 : vector<8x32xf32>
    %124 = arith.addf %123, %113 : vector<8x32xf32>
    %cst_46 = arith.constant dense<0.000000e+00> : vector<8xf32>
    %125 = vector.multi_reduction <add>, %124, %cst_46 [1] : vector<8x32xf32> to vector<8xf32>
    %126 = vector.shape_cast %125 : vector<8xf32> to vector<8x1xf32>
    %cst_47 = arith.constant 3.200000e+01 : f32
    %127 = vector.broadcast %cst_47 : f32 to vector<8x1xf32>
    %128 = arith.divf %126, %127 : vector<8x1xf32>
    %129 = vector.broadcast %128 : vector<8x1xf32> to vector<8x32xf32>
    %130 = arith.subf %124, %129 : vector<8x32xf32>
    %131 = arith.mulf %130, %130 : vector<8x32xf32>
    %cst_48 = arith.constant dense<0.000000e+00> : vector<8xf32>
    %132 = vector.multi_reduction <add>, %131, %cst_48 [1] : vector<8x32xf32> to vector<8xf32>
    %133 = vector.shape_cast %132 : vector<8xf32> to vector<8x1xf32>
    %cst_49 = arith.constant 3.200000e+01 : f32
    %134 = vector.broadcast %cst_49 : f32 to vector<8x1xf32>
    %135 = arith.divf %133, %134 : vector<8x1xf32>
    %136 = vector.broadcast %128 : vector<8x1xf32> to vector<8x32xf32>
    %137 = arith.subf %124, %136 : vector<8x32xf32>
    %cst_50 = arith.constant 9.99999974E-6 : f32
    %138 = vector.broadcast %cst_50 : f32 to vector<8x1xf32>
    %139 = arith.addf %135, %138 : vector<8x1xf32>
    %140 = math.rsqrt %139 : vector<8x1xf32>
    %141 = vector.broadcast %140 : vector<8x1xf32> to vector<8x32xf32>
    %142 = arith.mulf %137, %141 : vector<8x32xf32>
    %143 = vector.broadcast %26 : vector<1x32xf32> to vector<8x32xf32>
    %144 = arith.mulf %142, %143 : vector<8x32xf32>
    %145 = vector.broadcast %29 : vector<1x32xf32> to vector<8x32xf32>
    %146 = arith.addf %144, %145 : vector<8x32xf32>
    %c0_51 = arith.constant 0 : index
    %c0_52 = arith.constant 0 : index
    %147 = vector.load %arg16[%c0_51, %c0_52] : memref<8x32xf32, #tpu.memory_space<vmem>>, vector<8x32xf32>
    tpu.vector_store %arg16[%c0_51, %c0_52], %146 {strides = array<i32>} : memref<8x32xf32, #tpu.memory_space<vmem>>, vector<8x32xf32>,
    %c1_i32 = arith.constant 1 : i32
    %148 = arith.cmpi eq, %arg1, %c1_i32 : i32
    %149 = arith.extui %148 : i1 to i32
    %c0_i32_53 = arith.constant 0 : i32
    %150 = arith.cmpi ne, %149, %c0_i32_53 : i32
    scf.if %150 {
      %151 = vector.shape_cast %146 : vector<8x32xf32> to vector<1x8x32xf32>
      %cst_54 = arith.constant dense<0.000000e+00> : vector<1x32xf32>
      %152 = vector.multi_reduction <add>, %151, %cst_54 [1] : vector<1x8x32xf32> to vector<1x32xf32>
      %cst_55 = arith.constant 8.000000e+00 : f32
      %153 = vector.broadcast %cst_55 : f32 to vector<1x32xf32>
      %154 = arith.divf %152, %153 : vector<1x32xf32>
      %155 = arith.truncf %154 : vector<1x32xf32> to vector<1x32xbf16>
      %c0_56 = arith.constant 0 : index
      %c0_57 = arith.constant 0 : index
      %156 = vector.load %arg13[%c0_56, %c0_57] : memref<32x128xbf16, #tpu.memory_space<vmem>>, vector<32x128xbf16>
      %cst_58 = arith.constant dense<0.000000e+00> : vector<1x128xf32>
      %157 = tpu.matmul %155, %156, %cst_58 {dimension_numbers = #tpu.dot_dimension_numbers<[1], [0], [0], [1], [0, 0, 1, 1], [], []>} : vector<1x32xbf16>, vector<32x128xbf16>, vector<1x128xf32> -> vector<1x128xf32>
      %c0_59 = arith.constant 0 : index
      %c0_60 = arith.constant 0 : index
      %158 = vector.load %arg14[%c0_59, %c0_60] : memref<1x128xf32, #tpu.memory_space<vmem>>, vector<1x128xf32>
      %159 = arith.addf %157, %158 : vector<1x128xf32>
      %c0_61 = arith.constant 0 : index
      %c0_62 = arith.constant 0 : index
      %c0_63 = arith.constant 0 : index
      %160 = vector.load %arg15[%c0_61, %c0_62, %c0_63] : memref<1x1x128xf32, #tpu.memory_space<vmem>>, vector<1x1x128xf32>
      %161 = vector.shape_cast %160 : vector<1x1x128xf32> to vector<1x128xf32>
      %162 = vector.shape_cast %159 : vector<1x128xf32> to vector<1x1x128xf32>
      tpu.vector_store %arg15[%c0_61, %c0_62, %c0_63], %162 {strides = array<i32>} : memref<1x1x128xf32, #tpu.memory_space<vmem>>, vector<1x1x128xf32>,
    } else {
    }
    return
  }
  func.func @transform_0(%arg0: i32, %arg1: i32) -> (i32, i32, i32) {
    %c0_i32 = arith.constant 0 : i32
    %c0_i32_0 = arith.constant 0 : i32
    %c0_i32_1 = arith.constant 0 : i32
    return %arg0, %c0_i32, %c0_i32_0 : i32, i32, i32
  }
  func.func @transform_1(%arg0: i32, %arg1: i32) -> (i32, i32, i32) {
    %c0_i32 = arith.constant 0 : i32
    %c0_i32_0 = arith.constant 0 : i32
    %c0_i32_1 = arith.constant 0 : i32
    %c0_i32_2 = arith.constant 0 : i32
    return %c0_i32, %c0_i32_0, %c0_i32_1 : i32, i32, i32
  }
  func.func @transform_2(%arg0: i32, %arg1: i32) -> (i32, i32, i32) {
    %c0_i32 = arith.constant 0 : i32
    %c0_i32_0 = arith.constant 0 : i32
    %c0_i32_1 = arith.constant 0 : i32
    %c0_i32_2 = arith.constant 0 : i32
    return %c0_i32, %c0_i32_0, %c0_i32_1 : i32, i32, i32
  }
  func.func @transform_3(%arg0: i32, %arg1: i32) -> (i32, i32, i32) {
    %c0_i32 = arith.constant 0 : i32
    %c0_i32_0 = arith.constant 0 : i32
    %c0_i32_1 = arith.constant 0 : i32
    %c0_i32_2 = arith.constant 0 : i32
    return %c0_i32, %c0_i32_0, %c0_i32_1 : i32, i32, i32
  }
  func.func @transform_4(%arg0: i32, %arg1: i32) -> (i32, i32, i32) {
    %c0_i32 = arith.constant 0 : i32
    %c0_i32_0 = arith.constant 0 : i32
    %c0_i32_1 = arith.constant 0 : i32
    %c0_i32_2 = arith.constant 0 : i32
    return %c0_i32, %c0_i32_0, %c0_i32_1 : i32, i32, i32
  }
  func.func @transform_5(%arg0: i32, %arg1: i32) -> (i32, i32, i32) {
    %c0_i32 = arith.constant 0 : i32
    %c0_i32_0 = arith.constant 0 : i32
    %c0_i32_1 = arith.constant 0 : i32
    %c0_i32_2 = arith.constant 0 : i32
    return %c0_i32, %c0_i32_0, %c0_i32_1 : i32, i32, i32
  }
  func.func @transform_6(%arg0: i32, %arg1: i32) -> (i32, i32, i32) {
    %c0_i32 = arith.constant 0 : i32
    %c0_i32_0 = arith.constant 0 : i32
    %c0_i32_1 = arith.constant 0 : i32
    %c0_i32_2 = arith.constant 0 : i32
    return %c0_i32, %c0_i32_0, %c0_i32_1 : i32, i32, i32
  }
  func.func @transform_7(%arg0: i32, %arg1: i32) -> (i32, i32, i32) {
    %c0_i32 = arith.constant 0 : i32
    %c0_i32_0 = arith.constant 0 : i32
    %c0_i32_1 = arith.constant 0 : i32
    %c0_i32_2 = arith.constant 0 : i32
    return %c0_i32, %c0_i32_0, %c0_i32_1 : i32, i32, i32
  }
  func.func @transform_8(%arg0: i32, %arg1: i32) -> (i32, i32, i32) {
    %c0_i32 = arith.constant 0 : i32
    %c0_i32_0 = arith.constant 0 : i32
    %c0_i32_1 = arith.constant 0 : i32
    %c0_i32_2 = arith.constant 0 : i32
    return %c0_i32, %c0_i32_0, %c0_i32_1 : i32, i32, i32
  }
  func.func @transform_9(%arg0: i32, %arg1: i32) -> (i32, i32, i32) {
    %c0_i32 = arith.constant 0 : i32
    %c0_i32_0 = arith.constant 0 : i32
    %c0_i32_1 = arith.constant 0 : i32
    %c0_i32_2 = arith.constant 0 : i32
    return %c0_i32, %c0_i32_0, %c0_i32_1 : i32, i32, i32
  }
  func.func @transform_10(%arg0: i32, %arg1: i32) -> (i32, i32, i32) {
    %c0_i32 = arith.constant 0 : i32
    %c0_i32_0 = arith.constant 0 : i32
    %c0_i32_1 = arith.constant 0 : i32
    %c0_i32_2 = arith.constant 0 : i32
    return %c0_i32, %c0_i32_0, %c0_i32_1 : i32, i32, i32
  }
  func.func @transform_11(%arg0: i32, %arg1: i32) -> (i32, i32) {
    %c0_i32 = arith.constant 0 : i32
    %c0_i32_0 = arith.constant 0 : i32
    %c0_i32_1 = arith.constant 0 : i32
    return %c0_i32, %c0_i32_0 : i32, i32
  }
  func.func @transform_12(%arg0: i32, %arg1: i32) -> (i32, i32) {
    %c0_i32 = arith.constant 0 : i32
    %c0_i32_0 = arith.constant 0 : i32
    %c0_i32_1 = arith.constant 0 : i32
    return %c0_i32, %c0_i32_0 : i32, i32
  }
  func.func @transform_13(%arg0: i32, %arg1: i32) -> (i32, i32, i32) {
    %c0_i32 = arith.constant 0 : i32
    %c0_i32_0 = arith.constant 0 : i32
    %c0_i32_1 = arith.constant 0 : i32
    return %arg0, %c0_i32, %c0_i32_0 : i32, i32, i32
  }
}

</mosaic_0001>

<llo_original>
// kernel: tpu_custom_call.1
$region0: #{tpu_custom_call.1}
  #allocation0 [shape = 'u32[]', space=smem, size = 0x4, offset = 0x4, fixed_abs, tag = 'smem constant byte address 0x4 - core index']
  #allocation1 [shape = 'u32[72,128]{1,0:T(1,128)}', space=vmem, size = 0x9000, scoped, tag = 'internal scratch']
  #allocation2 [shape = 'f32[8,32]{1,0:T(8,128)}', space=vmem, size = 0x1000, scoped, tag = 'scratch operand']
  #allocation3 [shape = 'f32[8,32]{1,0:T(8,128)}', space=vmem, size = 0x1000, scoped, tag = 'scratch operand']
  %s0 = inlined_call_operand.hbm [shape: bf16[2,8,32], index: 0, kind: input, shape index: {}]
  %s1 = inlined_call_operand.hbm [shape: bf16[2,32,128], index: 1, kind: input, shape index: {}]
  %s2 = inlined_call_operand.hbm [shape: bf16[2,32,32], index: 2, kind: input, shape index: {}]
  %s3 = inlined_call_operand.vmem [shape: f32[2,1,32], index: 3, kind: input, shape index: {}]
  %s4 = inlined_call_operand.hbm [shape: f32[2,1,32], index: 4, kind: input, shape index: {}]
  %s5 = inlined_call_operand.hbm [shape: bf16[2,32,32], index: 5, kind: input, shape index: {}]
  %s6 = inlined_call_operand.vmem [shape: f32[2,1,32], index: 6, kind: input, shape index: {}]
  %s7 = inlined_call_operand.hbm [shape: bf16[2,32,32], index: 7, kind: input, shape index: {}]
  %s8 = inlined_call_operand.vmem [shape: f32[2,1,32], index: 8, kind: input, shape index: {}]
  %s9 = inlined_call_operand.vmem [shape: f32[2,1,32], index: 9, kind: input, shape index: {}]
  %s10 = inlined_call_operand.hbm [shape: f32[2,1,32], index: 10, kind: input, shape index: {}]
  %s11 = inlined_call_operand.hbm [shape: bf16[32,128], index: 11, kind: input, shape index: {}]
  %s12 = inlined_call_operand.vmem [shape: f32[1,128], index: 12, kind: input, shape index: {}]
  %s13 = inlined_call_operand.hbm [shape: f32[2,1,128], index: 13, kind: output, shape index: {}]
  %s14 = sld [smem:[#allocation0]]
  $region125: #{tpu_custom_call.1} parent=0
    _
  %s16 = ssub.s32 1, %s14
  %s17 = scalar_select 0, %s16, %s14
  $region1: #{tpu_custom_call.1} parent=0
    #allocation4 [shape = 'u8[4096]{0}', space=vmem, size = 0x1000, scoped, tag = 'input window, operand 0']
    #allocation5 [shape = 's32[2]{0}', space=sflag, size = 0x8, scoped, tag = 'scoped memory for tpu_custom_call.1']
    #allocation6 [shape = 's32[2]{0}', space=sflag, size = 0x8, scoped, tag = 'scoped memory for tpu_custom_call.1']
    #allocation7 [shape = 'u8[16384]{0}', space=vmem, size = 0x4000, scoped, tag = 'input window, operand 1, single buffered']
    #allocation8 [shape = 's32[1]{0}', space=sflag, size = 0x4, scoped, tag = 'scoped memory for tpu_custom_call.1']
    #allocation9 [shape = 'u8[16384]{0}', space=vmem, size = 0x4000, scoped, tag = 'input window, operand 2, single buffered']
    #allocation10 [shape = 'u8[1024]{0}', space=vmem, size = 0x400, scoped, tag = 'input window, operand 4, single buffered']
    #allocation11 [shape = 's32[1]{0}', space=sflag, size = 0x4, scoped, tag = 'scoped memory for tpu_custom_call.1']
    #allocation12 [shape = 'u8[16384]{0}', space=vmem, size = 0x4000, scoped, tag = 'input window, operand 5, single buffered']
    #allocation13 [shape = 'u8[16384]{0}', space=vmem, size = 0x4000, scoped, tag = 'input window, operand 7, single buffered']
    #allocation14 [shape = 's32[1]{0}', space=sflag, size = 0x4, scoped, tag = 'scoped memory for tpu_custom_call.1']
    #allocation15 [shape = 'u8[1024]{0}', space=vmem, size = 0x400, scoped, tag = 'input window, operand 10, single buffered']
    #allocation16 [shape = 'u8[8192]{0}', space=vmem, size = 0x2000, scoped, tag = 'input window, operand 11, single buffered']
    #allocation17 [shape = 's32[1]{0}', space=sflag, size = 0x4, scoped, tag = 'scoped memory for tpu_custom_call.1']
    #allocation18 [shape = 'u8[1024]{0}', space=vmem, size = 0x400, scoped, tag = 'output window, operand 0']
    %18 = vsyncpa [#allocation5], 0
    %s19 = scalar_lea.sflag [#allocation5], 1
    %20 = vsyncpa %s19, 0
    %21 = vsyncpa [#allocation8], 0
    %22 = vsyncpa [#allocation11], 0
    %23 = vsyncpa [#allocation14], 0
    %24 = vsyncpa [#allocation17], 0
    %25 = vsyncpa [#allocation6], 0
    %s26 = scalar_lea.sflag [#allocation6], 1
    %27 = vsyncpa %s26, 0
    loop: start=0, step=1, limit=6
    $region2: #{tpu_custom_call.1} parent=1 // loop_pre_header
      _
    $region3: #{tpu_custom_call.1} parent=1 // loop_header
      %s29 = sphi 0, %s33
      %p30 = scmp.ge.s32.totalorder %s29, 6
      %s36 = sphi 0, %s48
      %s37 = sphi 0, %s44
      %s38 = sphi 0, %s36
      %s39 = sphi 0, %s37
      %s40 = sphi 0, %s38
      %s41 = sphi 0, %s39
      %s51 = sphi 0, %s53
      %s54 = sphi 0, %s51
      %s55 = sphi 0, %s54
      %s71 = sphi 0, %s55
      %s75 = sphi 0, %s75
      %s77 = sphi 0, %s75
      %s78 = sphi 0, %s77
      %s92 = sphi 0, %s78
      %s96 = sphi 0, %s96
      %s98 = sphi 0, %s96
      %s99 = sphi 0, %s98
      %s113 = sphi 0, %s99
      %s117 = sphi 0, %s117
      %s119 = sphi 0, %s117
      %s120 = sphi 0, %s119
      %s134 = sphi 0, %s120
      %s138 = sphi 0, %s138
      %s140 = sphi 0, %s138
      %s141 = sphi 0, %s140
      %s155 = sphi 0, %s141
      %s159 = sphi 0, %s159
      %s161 = sphi 0, %s159
      %s162 = sphi 0, %s161
      %s176 = sphi 0, %s162
      %s180 = sphi 0, %s180
      %s182 = sphi 0, %s180
      %s183 = sphi 0, %s182
      %s197 = sphi 0, %s183
      %s201 = sphi 0, %s201
      %s203 = sphi 0, %s201
      %s204 = sphi 0, %s203
      %s218 = sphi 0, %s204
      %s222 = sphi 0, %s222
      %s224 = sphi 0, %s222
      %s225 = sphi 0, %s224
      %s239 = sphi 0, %s225
      %s243 = sphi 0, %s243
      %s245 = sphi 0, %s243
      %s246 = sphi 0, %s245
      %s260 = sphi 0, %s246
      %s264 = sphi 0, %s264
      %s266 = sphi 0, %s264
      %s267 = sphi 0, %s266
      %s281 = sphi 0, %s267
      %s285 = sphi 0, %s285
      %s287 = sphi 0, %s285
      %s288 = sphi 0, %s287
      %s302 = sphi 0, %s288
      %s306 = sphi 0, %s306
      %s308 = sphi 0, %s306
      %s309 = sphi 0, %s308
      %s323 = sphi 0, %s309
      %s329 = sphi 0, %s331
      %s332 = sphi 0, %s329
      %s333 = sphi 0, %s332
      %s349 = sphi 0, %s333
    $region4: #{tpu_custom_call.1} parent=1 // loop_header_branch
      %32 = sbr.rel (%p30) target = $region8
    $region5: #{tpu_custom_call.1} parent=1 // loop_body
      %s34 = ssub.s32 %s29, 1
      %s35 = ssub.s32 %s29, 2
      %s42 = sadd.s32 1, %s37
      %p43 = scmp.ge.s32.totalorder %s42, 2
      %s44 = scalar_select %p43, 0, %s42
      %s45 = sadd.s32 1, %s36
      %s46 = scalar_select %p43, %s45, %s36
      %p47 = scmp.ge.s32.totalorder %s46, 2
      %s48 = scalar_select %p47, 0, %s46
      %s49 = ssub.s32 %s36, %s48
      %p50 = scmp.eq.s32.totalorder %s49, 0
      %s52 = sadd.s32 %s51, 1
      %s53 = scalar_select %p50, %s51, %s52
      %p56 = pneg %p50
      %p57 = scmp.eq.s32.totalorder %s29, 3
      %p58 = por %p56, %p57
      %p59 = scmp.ne.s32.totalorder %s51, %s54
      %p60 = scmp.eq.s32.totalorder %s29, 0
      %p61 = por %p59, %p60
      %p62 = scmp.ne.s32.totalorder %s51, %s54
      %p63 = scmp.eq.s32.totalorder %s34, 3
      %p64 = por %p62, %p63
      %p65 = scmp.ne.s32.totalorder %s54, %s55
      %p66 = scmp.eq.s32.totalorder %s34, 0
      %p67 = por %p65, %p66
      %p68 = scmp.ne.s32.totalorder %s54, %s55
      %p69 = scmp.eq.s32.totalorder %s35, 3
      %p70 = por %p68, %p69
      %p72 = scmp.ne.s32.totalorder %s55, %s71
      %p73 = scmp.eq.s32.totalorder %s35, 0
      %p74 = por %p72, %p73
      %s76 = sadd.s32 %s75, 1
      %p79 = scmp.eq.s32.totalorder %s29, 3
      %p80 = scmp.ne.s32.totalorder %s75, %s77
      %p81 = scmp.eq.s32.totalorder %s29, 0
      %p82 = por %p80, %p81
      %p83 = scmp.ne.s32.totalorder %s75, %s77
      %p84 = scmp.eq.s32.totalorder %s34, 3
      %p85 = por %p83, %p84
      %p86 = scmp.ne.s32.totalorder %s77, %s78
      %p87 = scmp.eq.s32.totalorder %s34, 0
      %p88 = por %p86, %p87
      %p89 = scmp.ne.s32.totalorder %s77, %s78
      %p90 = scmp.eq.s32.totalorder %s35, 3
      %p91 = por %p89, %p90
      %p93 = scmp.ne.s32.totalorder %s78, %s92
      %p94 = scmp.eq.s32.totalorder %s35, 0
      %p95 = por %p93, %p94
      %s97 = sadd.s32 %s96, 1
      %p100 = scmp.eq.s32.totalorder %s29, 3
      %p101 = scmp.ne.s32.totalorder %s96, %s98
      %p102 = scmp.eq.s32.totalorder %s29, 0
      %p103 = por %p101, %p102
      %p104 = scmp.ne.s32.totalorder %s96, %s98
      %p105 = scmp.eq.s32.totalorder %s34, 3
      %p106 = por %p104, %p105
      %p107 = scmp.ne.s32.totalorder %s98, %s99
      %p108 = scmp.eq.s32.totalorder %s34, 0
      %p109 = por %p107, %p108
      %p110 = scmp.ne.s32.totalorder %s98, %s99
      %p111 = scmp.eq.s32.totalorder %s35, 3
      %p112 = por %p110, %p111
      %p114 = scmp.ne.s32.totalorder %s99, %s113
      %p115 = scmp.eq.s32.totalorder %s35, 0
      %p116 = por %p114, %p115
      %s118 = sadd.s32 %s117, 1
      %p121 = scmp.eq.s32.totalorder %s29, 3
      %p122 = scmp.ne.s32.totalorder %s117, %s119
      %p123 = scmp.eq.s32.totalorder %s29, 0
      %p124 = por %p122, %p123
      %p125 = scmp.ne.s32.totalorder %s117, %s119
      %p126 = scmp.eq.s32.totalorder %s34, 3
      %p127 = por %p125, %p126
      %p128 = scmp.ne.s32.totalorder %s119, %s120
      %p129 = scmp.eq.s32.totalorder %s34, 0
      %p130 = por %p128, %p129
      %p131 = scmp.ne.s32.totalorder %s119, %s120
      %p132 = scmp.eq.s32.totalorder %s35, 3
      %p133 = por %p131, %p132
      %p135 = scmp.ne.s32.totalorder %s120, %s134
      %p136 = scmp.eq.s32.totalorder %s35, 0
      %p137 = por %p135, %p136
      %s139 = sadd.s32 %s138, 1
      %p142 = scmp.eq.s32.totalorder %s29, 3
      %p143 = scmp.ne.s32.totalorder %s138, %s140
      %p144 = scmp.eq.s32.totalorder %s29, 0
      %p145 = por %p143, %p144
      %p146 = scmp.ne.s32.totalorder %s138, %s140
      %p147 = scmp.eq.s32.totalorder %s34, 3
      %p148 = por %p146, %p147
      %p149 = scmp.ne.s32.totalorder %s140, %s141
      %p150 = scmp.eq.s32.totalorder %s34, 0
      %p151 = por %p149, %p150
      %p152 = scmp.ne.s32.totalorder %s140, %s141
      %p153 = scmp.eq.s32.totalorder %s35, 3
      %p154 = por %p152, %p153
      %p156 = scmp.ne.s32.totalorder %s141, %s155
      %p157 = scmp.eq.s32.totalorder %s35, 0
      %p158 = por %p156, %p157
      %s160 = sadd.s32 %s159, 1
      %p163 = scmp.eq.s32.totalorder %s29, 3
      %p164 = scmp.ne.s32.totalorder %s159, %s161
      %p165 = scmp.eq.s32.totalorder %s29, 0
      %p166 = por %p164, %p165
      %p167 = scmp.ne.s32.totalorder %s159, %s161
      %p168 = scmp.eq.s32.totalorder %s34, 3
      %p169 = por %p167, %p168
      %p170 = scmp.ne.s32.totalorder %s161, %s162
      %p171 = scmp.eq.s32.totalorder %s34, 0
      %p172 = por %p170, %p171
      %p173 = scmp.ne.s32.totalorder %s161, %s162
      %p174 = scmp.eq.s32.totalorder %s35, 3
      %p175 = por %p173, %p174
      %p177 = scmp.ne.s32.totalorder %s162, %s176
      %p178 = scmp.eq.s32.totalorder %s35, 0
      %p179 = por %p177, %p178
      %s181 = sadd.s32 %s180, 1
      %p184 = scmp.eq.s32.totalorder %s29, 3
      %p185 = scmp.ne.s32.totalorder %s180, %s182
      %p186 = scmp.eq.s32.totalorder %s29, 0
      %p187 = por %p185, %p186
      %p188 = scmp.ne.s32.totalorder %s180, %s182
      %p189 = scmp.eq.s32.totalorder %s34, 3
      %p190 = por %p188, %p189
      %p191 = scmp.ne.s32.totalorder %s182, %s183
      %p192 = scmp.eq.s32.totalorder %s34, 0
      %p193 = por %p191, %p192
      %p194 = scmp.ne.s32.totalorder %s182, %s183
      %p195 = scmp.eq.s32.totalorder %s35, 3
      %p196 = por %p194, %p195
      %p198 = scmp.ne.s32.totalorder %s183, %s197
      %p199 = scmp.eq.s32.totalorder %s35, 0
      %p200 = por %p198, %p199
      %s202 = sadd.s32 %s201, 1
      %p205 = scmp.eq.s32.totalorder %s29, 3
      %p206 = scmp.ne.s32.totalorder %s201, %s203
      %p207 = scmp.eq.s32.totalorder %s29, 0
      %p208 = por %p206, %p207
      %p209 = scmp.ne.s32.totalorder %s201, %s203
      %p210 = scmp.eq.s32.totalorder %s34, 3
      %p211 = por %p209, %p210
      %p212 = scmp.ne.s32.totalorder %s203, %s204
      %p213 = scmp.eq.s32.totalorder %s34, 0
      %p214 = por %p212, %p213
      %p215 = scmp.ne.s32.totalorder %s203, %s204
      %p216 = scmp.eq.s32.totalorder %s35, 3
      %p217 = por %p215, %p216
      %p219 = scmp.ne.s32.totalorder %s204, %s218
      %p220 = scmp.eq.s32.totalorder %s35, 0
      %p221 = por %p219, %p220
      %s223 = sadd.s32 %s222, 1
      %p226 = scmp.eq.s32.totalorder %s29, 3
      %p227 = scmp.ne.s32.totalorder %s222, %s224
      %p228 = scmp.eq.s32.totalorder %s29, 0
      %p229 = por %p227, %p228
      %p230 = scmp.ne.s32.totalorder %s222, %s224
      %p231 = scmp.eq.s32.totalorder %s34, 3
      %p232 = por %p230, %p231
      %p233 = scmp.ne.s32.totalorder %s224, %s225
      %p234 = scmp.eq.s32.totalorder %s34, 0
      %p235 = por %p233, %p234
      %p236 = scmp.ne.s32.totalorder %s224, %s225
      %p237 = scmp.eq.s32.totalorder %s35, 3
      %p238 = por %p236, %p237
      %p240 = scmp.ne.s32.totalorder %s225, %s239
      %p241 = scmp.eq.s32.totalorder %s35, 0
      %p242 = por %p240, %p241
      %s244 = sadd.s32 %s243, 1
      %p247 = scmp.eq.s32.totalorder %s29, 3
      %p248 = scmp.ne.s32.totalorder %s243, %s245
      %p249 = scmp.eq.s32.totalorder %s29, 0
      %p250 = por %p248, %p249
      %p251 = scmp.ne.s32.totalorder %s243, %s245
      %p252 = scmp.eq.s32.totalorder %s34, 3
      %p253 = por %p251, %p252
      %p254 = scmp.ne.s32.totalorder %s245, %s246
      %p255 = scmp.eq.s32.totalorder %s34, 0
      %p256 = por %p254, %p255
      %p257 = scmp.ne.s32.totalorder %s245, %s246
      %p258 = scmp.eq.s32.totalorder %s35, 3
      %p259 = por %p257, %p258
      %p261 = scmp.ne.s32.totalorder %s246, %s260
      %p262 = scmp.eq.s32.totalorder %s35, 0
      %p263 = por %p261, %p262
      %s265 = sadd.s32 %s264, 1
      %p268 = scmp.eq.s32.totalorder %s29, 3
      %p269 = scmp.ne.s32.totalorder %s264, %s266
      %p270 = scmp.eq.s32.totalorder %s29, 0
      %p271 = por %p269, %p270
      %p272 = scmp.ne.s32.totalorder %s264, %s266
      %p273 = scmp.eq.s32.totalorder %s34, 3
      %p274 = por %p272, %p273
      %p275 = scmp.ne.s32.totalorder %s266, %s267
      %p276 = scmp.eq.s32.totalorder %s34, 0
      %p277 = por %p275, %p276
      %p278 = scmp.ne.s32.totalorder %s266, %s267
      %p279 = scmp.eq.s32.totalorder %s35, 3
      %p280 = por %p278, %p279
      %p282 = scmp.ne.s32.totalorder %s267, %s281
      %p283 = scmp.eq.s32.totalorder %s35, 0
      %p284 = por %p282, %p283
      %s286 = sadd.s32 %s285, 1
      %p289 = scmp.eq.s32.totalorder %s29, 3
      %p290 = scmp.ne.s32.totalorder %s285, %s287
      %p291 = scmp.eq.s32.totalorder %s29, 0
      %p292 = por %p290, %p291
      %p293 = scmp.ne.s32.totalorder %s285, %s287
      %p294 = scmp.eq.s32.totalorder %s34, 3
      %p295 = por %p293, %p294
      %p296 = scmp.ne.s32.totalorder %s287, %s288
      %p297 = scmp.eq.s32.totalorder %s34, 0
      %p298 = por %p296, %p297
      %p299 = scmp.ne.s32.totalorder %s287, %s288
      %p300 = scmp.eq.s32.totalorder %s35, 3
      %p301 = por %p299, %p300
      %p303 = scmp.ne.s32.totalorder %s288, %s302
      %p304 = scmp.eq.s32.totalorder %s35, 0
      %p305 = por %p303, %p304
      %s307 = sadd.s32 %s306, 1
      %p310 = scmp.eq.s32.totalorder %s29, 3
      %p311 = scmp.ne.s32.totalorder %s306, %s308
      %p312 = scmp.eq.s32.totalorder %s29, 0
      %p313 = por %p311, %p312
      %p314 = scmp.ne.s32.totalorder %s306, %s308
      %p315 = scmp.eq.s32.totalorder %s34, 3
      %p316 = por %p314, %p315
      %p317 = scmp.ne.s32.totalorder %s308, %s309
      %p318 = scmp.eq.s32.totalorder %s34, 0
      %p319 = por %p317, %p318
      %p320 = scmp.ne.s32.totalorder %s308, %s309
      %p321 = scmp.eq.s32.totalorder %s35, 3
      %p322 = por %p320, %p321
      %p324 = scmp.ne.s32.totalorder %s309, %s323
      %p325 = scmp.eq.s32.totalorder %s35, 0
      %p326 = por %p324, %p325
      %s327 = ssub.s32 %s36, %s48
      %p328 = scmp.eq.s32.totalorder %s327, 0
      %s330 = sadd.s32 %s329, 1
      %s331 = scalar_select %p328, %s329, %s330
      %p334 = pneg %p328
      %p335 = scmp.eq.s32.totalorder %s29, 3
      %p336 = por %p334, %p335
      %p337 = scmp.ne.s32.totalorder %s329, %s332
      %p338 = scmp.eq.s32.totalorder %s29, 0
      %p339 = por %p337, %p338
      %p340 = scmp.ne.s32.totalorder %s329, %s332
      %p341 = scmp.eq.s32.totalorder %s34, 3
      %p342 = por %p340, %p341
      %p343 = scmp.ne.s32.totalorder %s332, %s333
      %p344 = scmp.eq.s32.totalorder %s34, 0
      %p345 = por %p343, %p344
      %p346 = scmp.ne.s32.totalorder %s332, %s333
      %p347 = scmp.eq.s32.totalorder %s35, 3
      %p348 = por %p346, %p347
      %p350 = scmp.ne.s32.totalorder %s333, %s349
      %p351 = scmp.eq.s32.totalorder %s35, 0
      %p352 = por %p350, %p351
      %p353 = scmp.le.s32.totalorder 1, %s29
      %p354 = scmp.lt.s32.totalorder %s29, 5
      %p355 = pnand %p353, %p354
      %p356 = pneg %p355
      // Predicated region
      $region9: #{tpu_custom_call.1} parent=5 // pred_check
        _
      $region10: #{tpu_custom_call.1} parent=5 // pred_check_branch
        %358 = sbr.rel (%p355) target = $region12
      $region11: #{tpu_custom_call.1} parent=5 // pred_region
        %s359 = ssub.s32 %s29, 1
        // Predicated region
        $region13: #{tpu_custom_call.1} parent=11 // pred_check
          %p360 = pneg %p88
        $region14: #{tpu_custom_call.1} parent=11 // pred_check_branch
          %362 = sbr.rel (%p360) target = $region16
        $region15: #{tpu_custom_call.1} parent=11 // pred_region
          %364 = vsyncadd [#allocation8], 0
          %s365 = sshll.u32 %s1, 4
          %s366 = int_to_ptr.hbm [resolvable:$true] %s365
          %s367 = sshll.u32 [#allocation7], 4
          %s368 = int_to_ptr.vmem [resolvable:$true] %s367
          %373 = dma.hbm_to_vmem [thread:$0]  %s366, 512, %s368, [#allocation8], 64, 64, 4
        $region16: #{tpu_custom_call.1} parent=11 // pred_fallthru
          _
        // Predicated region
        $region17: #{tpu_custom_call.1} parent=11 // pred_check
          %p374 = pneg %p109
        $region18: #{tpu_custom_call.1} parent=11 // pred_check_branch
          %376 = sbr.rel (%p374) target = $region20
        $region19: #{tpu_custom_call.1} parent=11 // pred_region
          %378 = vsyncadd [#allocation8], 0
          %s379 = sshll.u32 %s2, 4
          %s380 = int_to_ptr.hbm [resolvable:$true] %s379
          %s381 = sshll.u32 [#allocation9], 4
          %s382 = int_to_ptr.vmem [resolvable:$true] %s381
          %387 = dma.hbm_to_vmem [thread:$0]  %s380, 512, %s382, [#allocation8], 64, 64, 4
        $region20: #{tpu_custom_call.1} parent=11 // pred_fallthru
          _
        // Predicated region
        $region21: #{tpu_custom_call.1} parent=11 // pred_check
          %p388 = pneg %p130
        $region22: #{tpu_custom_call.1} parent=11 // pred_check_branch
          %390 = sbr.rel (%p388) target = $region24
        $region23: #{tpu_custom_call.1} parent=11 // pred_region
          _
        $region24: #{tpu_custom_call.1} parent=11 // pred_fallthru
          _
        // Predicated region
        $region25: #{tpu_custom_call.1} parent=11 // pred_check
          %p391 = pneg %p151
        $region26: #{tpu_custom_call.1} parent=11 // pred_check_branch
          %393 = sbr.rel (%p391) target = $region28
        $region27: #{tpu_custom_call.1} parent=11 // pred_region
          %395 = vsyncadd [#allocation11], 0
          %s396 = sshll.u32 %s4, 4
          %s397 = int_to_ptr.hbm [resolvable:$true] %s396
          %s398 = sshll.u32 [#allocation10], 4
          %s399 = int_to_ptr.vmem [resolvable:$true] %s398
          %404 = dma.hbm_to_vmem [thread:$0]  %s397, 32, %s399, [#allocation11], 16, 16, 1
        $region28: #{tpu_custom_call.1} parent=11 // pred_fallthru
          _
        // Predicated region
        $region29: #{tpu_custom_call.1} parent=11 // pred_check
          %p405 = pneg %p172
        $region30: #{tpu_custom_call.1} parent=11 // pred_check_branch
          %407 = sbr.rel (%p405) target = $region32
        $region31: #{tpu_custom_call.1} parent=11 // pred_region
          %409 = vsyncadd [#allocation11], 0
          %s410 = sshll.u32 %s5, 4
          %s411 = int_to_ptr.hbm [resolvable:$true] %s410
          %s412 = sshll.u32 [#allocation12], 4
          %s413 = int_to_ptr.vmem [resolvable:$true] %s412
          %418 = dma.hbm_to_vmem [thread:$0]  %s411, 512, %s413, [#allocation11], 64, 64, 4
        $region32: #{tpu_custom_call.1} parent=11 // pred_fallthru
          _
        // Predicated region
        $region33: #{tpu_custom_call.1} parent=11 // pred_check
          %p419 = pneg %p193
        $region34: #{tpu_custom_call.1} parent=11 // pred_check_branch
          %421 = sbr.rel (%p419) target = $region36
        $region35: #{tpu_custom_call.1} parent=11 // pred_region
          _
        $region36: #{tpu_custom_call.1} parent=11 // pred_fallthru
          _
        // Predicated region
        $region37: #{tpu_custom_call.1} parent=11 // pred_check
          %p422 = pneg %p214
        $region38: #{tpu_custom_call.1} parent=11 // pred_check_branch
          %424 = sbr.rel (%p422) target = $region40
        $region39: #{tpu_custom_call.1} parent=11 // pred_region
          %426 = vsyncadd [#allocation14], 0
          %s427 = sshll.u32 %s7, 4
          %s428 = int_to_ptr.hbm [resolvable:$true] %s427
          %s429 = sshll.u32 [#allocation13], 4
          %s430 = int_to_ptr.vmem [resolvable:$true] %s429
          %435 = dma.hbm_to_vmem [thread:$0]  %s428, 512, %s430, [#allocation14], 64, 64, 4
        $region40: #{tpu_custom_call.1} parent=11 // pred_fallthru
          _
        // Predicated region
        $region41: #{tpu_custom_call.1} parent=11 // pred_check
          %p436 = pneg %p235
        $region42: #{tpu_custom_call.1} parent=11 // pred_check_branch
          %438 = sbr.rel (%p436) target = $region44
        $region43: #{tpu_custom_call.1} parent=11 // pred_region
          _
        $region44: #{tpu_custom_call.1} parent=11 // pred_fallthru
          _
        // Predicated region
        $region45: #{tpu_custom_call.1} parent=11 // pred_check
          %p439 = pneg %p256
        $region46: #{tpu_custom_call.1} parent=11 // pred_check_branch
          %441 = sbr.rel (%p439) target = $region48
        $region47: #{tpu_custom_call.1} parent=11 // pred_region
          _
        $region48: #{tpu_custom_call.1} parent=11 // pred_fallthru
          _
        // Predicated region
        $region49: #{tpu_custom_call.1} parent=11 // pred_check
          %p442 = pneg %p277
        $region50: #{tpu_custom_call.1} parent=11 // pred_check_branch
          %444 = sbr.rel (%p442) target = $region52
        $region51: #{tpu_custom_call.1} parent=11 // pred_region
          %446 = vsyncadd [#allocation14], 0
          %s447 = sshll.u32 %s10, 4
          %s448 = int_to_ptr.hbm [resolvable:$true] %s447
          %s449 = sshll.u32 [#allocation15], 4
          %s450 = int_to_ptr.vmem [resolvable:$true] %s449
          %455 = dma.hbm_to_vmem [thread:$0]  %s448, 32, %s450, [#allocation14], 16, 16, 1
        $region52: #{tpu_custom_call.1} parent=11 // pred_fallthru
          _
        // Predicated region
        $region53: #{tpu_custom_call.1} parent=11 // pred_check
          %p456 = pneg %p298
        $region54: #{tpu_custom_call.1} parent=11 // pred_check_branch
          %458 = sbr.rel (%p456) target = $region56
        $region55: #{tpu_custom_call.1} parent=11 // pred_region
          %460 = vsyncadd [#allocation17], 0
          %s461 = sshll.u32 %s11, 4
          %s462 = int_to_ptr.hbm [resolvable:$true] %s461
          %s463 = sshll.u32 [#allocation16], 4
          %s464 = int_to_ptr.vmem [resolvable:$true] %s463
          %469 = dma.hbm_to_vmem [thread:$0]  %s462, 256, %s464, [#allocation17], 64, 64, 4
        $region56: #{tpu_custom_call.1} parent=11 // pred_fallthru
          _
        // Predicated region
        $region57: #{tpu_custom_call.1} parent=11 // pred_check
          %p470 = pneg %p319
        $region58: #{tpu_custom_call.1} parent=11 // pred_check_branch
          %472 = sbr.rel (%p470) target = $region60
        $region59: #{tpu_custom_call.1} parent=11 // pred_region
          _
        $region60: #{tpu_custom_call.1} parent=11 // pred_fallthru
          _
      $region12: #{tpu_custom_call.1} parent=5 // pred_fallthru
        _
      %p473 = scmp.lt.s32.totalorder %s29, 4
      // Predicated region
      $region61: #{tpu_custom_call.1} parent=5 // pred_check
        %p474 = pneg %p473
      $region62: #{tpu_custom_call.1} parent=5 // pred_check_branch
        %476 = sbr.rel (%p474) target = $region64
      $region63: #{tpu_custom_call.1} parent=5 // pred_region
        // Predicated region
        $region65: #{tpu_custom_call.1} parent=63 // pred_check
          %p477 = pneg %p61
        $region66: #{tpu_custom_call.1} parent=63 // pred_check_branch
          %479 = sbr.rel (%p477) target = $region68
        $region67: #{tpu_custom_call.1} parent=63 // pred_region
          %s480 = sand.u32 %s51, 1
          %s481 = scalar_lea.sflag [#allocation5], %s480
          %s482 = sand.u32 %s51, 1
          %s483 = smul.addr %s482, 4
          %s484 = scalar_lea.vmem [#allocation4], %s483
          %486 = vsyncadd %s481, 0
          %s487 = smul.addr %s36, 4
          %s488 = scalar_lea.hbm %s0, %s487
          %s490 = sshll.u32 %s488, 4
          %s491 = int_to_ptr.hbm [resolvable:$true] %s490
          %s492 = sshll.u32 %s484, 4
          %s493 = int_to_ptr.vmem [resolvable:$true] %s492
          %495 = dma.hbm_to_vmem [thread:$0]  %s491, 64, %s493, %s481
        $region68: #{tpu_custom_call.1} parent=63 // pred_fallthru
          _
      $region64: #{tpu_custom_call.1} parent=5 // pred_fallthru
        _
      %p496 = scmp.le.s32.totalorder 1, %s29
      %p497 = scmp.lt.s32.totalorder %s29, 5
      %p498 = pnand %p496, %p497
      %p499 = pneg %p498
      // Predicated region
      $region69: #{tpu_custom_call.1} parent=5 // pred_check
        _
      $region70: #{tpu_custom_call.1} parent=5 // pred_check_branch
        %501 = sbr.rel (%p498) target = $region72
      $region71: #{tpu_custom_call.1} parent=5 // pred_region
        %s502 = ssub.s32 %s29, 1
        %s503 = sand.u32 %s54, 1
        %s504 = scalar_lea.sflag [#allocation5], %s503
        %s505 = sand.u32 %s54, 1
        %s506 = smul.addr %s505, 4
        %s507 = scalar_lea.vmem [#allocation4], %s506
        // Predicated region
        $region73: #{tpu_custom_call.1} parent=71 // pred_check
          %p508 = pneg %p67
        $region74: #{tpu_custom_call.1} parent=71 // pred_check_branch
          %510 = sbr.rel (%p508) target = $region76
        $region75: #{tpu_custom_call.1} parent=71 // pred_region
          %512 = dma.done %s504, 64
        $region76: #{tpu_custom_call.1} parent=71 // pred_fallthru
          _
        // Predicated region
        $region77: #{tpu_custom_call.1} parent=71 // pred_check
          %p513 = pneg %p88
        $region78: #{tpu_custom_call.1} parent=71 // pred_check_branch
          %515 = sbr.rel (%p513) target = $region80
        $region79: #{tpu_custom_call.1} parent=71 // pred_region
          %517 = dma.done [#allocation8], 512
        $region80: #{tpu_custom_call.1} parent=71 // pred_fallthru
          _
        // Predicated region
        $region81: #{tpu_custom_call.1} parent=71 // pred_check
          %p518 = pneg %p109
        $region82: #{tpu_custom_call.1} parent=71 // pred_check_branch
          %520 = sbr.rel (%p518) target = $region84
        $region83: #{tpu_custom_call.1} parent=71 // pred_region
          %522 = dma.done [#allocation8], 512
        $region84: #{tpu_custom_call.1} parent=71 // pred_fallthru
          _
        // Predicated region
        $region85: #{tpu_custom_call.1} parent=71 // pred_check
          %p523 = pneg %p151
        $region86: #{tpu_custom_call.1} parent=71 // pred_check_branch
          %525 = sbr.rel (%p523) target = $region88
        $region87: #{tpu_custom_call.1} parent=71 // pred_region
          %527 = dma.done [#allocation11], 32
        $region88: #{tpu_custom_call.1} parent=71 // pred_fallthru
          _
        // Predicated region
        $region89: #{tpu_custom_call.1} parent=71 // pred_check
          %p528 = pneg %p172
        $region90: #{tpu_custom_call.1} parent=71 // pred_check_branch
          %530 = sbr.rel (%p528) target = $region92
        $region91: #{tpu_custom_call.1} parent=71 // pred_region
          %532 = dma.done [#allocation11], 512
        $region92: #{tpu_custom_call.1} parent=71 // pred_fallthru
          _
        // Predicated region
        $region93: #{tpu_custom_call.1} parent=71 // pred_check
          %p533 = pneg %p214
        $region94: #{tpu_custom_call.1} parent=71 // pred_check_branch
          %535 = sbr.rel (%p533) target = $region96
        $region95: #{tpu_custom_call.1} parent=71 // pred_region
          %537 = dma.done [#allocation14], 512
        $region96: #{tpu_custom_call.1} parent=71 // pred_fallthru
          _
        // Predicated region
        $region97: #{tpu_custom_call.1} parent=71 // pred_check
          %p538 = pneg %p277
        $region98: #{tpu_custom_call.1} parent=71 // pred_check_branch
          %540 = sbr.rel (%p538) target = $region100
        $region99: #{tpu_custom_call.1} parent=71 // pred_region
          %542 = dma.done [#allocation14], 32
        $region100: #{tpu_custom_call.1} parent=71 // pred_fallthru
          _
        // Predicated region
        $region101: #{tpu_custom_call.1} parent=71 // pred_check
          %p543 = pneg %p298
        $region102: #{tpu_custom_call.1} parent=71 // pred_check_branch
          %545 = sbr.rel (%p543) target = $region104
        $region103: #{tpu_custom_call.1} parent=71 // pred_region
          %547 = dma.done [#allocation17], 256
        $region104: #{tpu_custom_call.1} parent=71 // pred_fallthru
          _
        %s548 = sand.u32 %s54, 1
        %s549 = scalar_lea.sflag [#allocation5], %s548
        %s550 = sand.u32 %s54, 1
        %s551 = smul.addr %s550, 4
        %s552 = scalar_lea.vmem [#allocation4], %s551
        %p553 = pneg %p67
        %p554 = pneg %p64
        %p555 = pneg %p88
        %p556 = pneg %p85
        %p557 = pneg %p109
        %p558 = pneg %p106
        %p559 = pneg %p130
        %p560 = pneg %p127
        %p561 = pneg %p151
        %p562 = pneg %p148
        %p563 = pneg %p172
        %p564 = pneg %p169
        %p565 = pneg %p193
        %p566 = pneg %p190
        %p567 = pneg %p214
        %p568 = pneg %p211
        %p569 = pneg %p235
        %p570 = pneg %p232
        %p571 = pneg %p256
        %p572 = pneg %p253
        %p573 = pneg %p277
        %p574 = pneg %p274
        %p575 = pneg %p298
        %p576 = pneg %p295
        %p577 = pneg %p319
        %p578 = pneg %p316
        %p579 = pneg %p345
        %p580 = pneg %p342
        %s581 = sand.u32 %s332, 1
        %s582 = scalar_lea.sflag [#allocation6], %s581
        %s583 = sand.u32 %s332, 1
        %s584 = scalar_lea.vmem [#allocation18], %s583
        %s586 = smul.u32 %s39, 4
        %s587 = smul.addr %s586, 4
        %s588 = scalar_lea.vmem [#allocation7], %s587
        %v589 = vld [vmem:[%s588] sm:$0xf]
        %v590 = vld [vmem:[%s588 + $0x4] sm:$0xf]
        %v591 = vld [vmem:[%s588 + $0x8] sm:$0xf]
        %v592 = vld [vmem:[%s588 + $0xc] sm:$0xf]
        %s593 = smul.addr %s586, 4
        %s594 = scalar_lea.vmem [#allocation9], %s593
        %v595 = vld [vmem:[%s594] sm:$0xf]
        %v596 = vld [vmem:[%s594 + $0x4] sm:$0xf]
        %v597 = vld [vmem:[%s594 + $0x8] sm:$0xf]
        %v598 = vld [vmem:[%s594 + $0xc] sm:$0xf]
        %s599 = scalar_lea.vmem %s3, %s39
        %v600 = vld [vmem:[%s599] sm:$0x1]
        %s601 = scalar_lea.vmem [#allocation10], %s39
        %v602 = vld [vmem:[%s601] sm:$0x1]
        %s603 = smul.addr %s586, 4
        %s604 = scalar_lea.vmem [#allocation12], %s603
        %v605 = vld [vmem:[%s604] sm:$0xf]
        %v606 = vld [vmem:[%s604 + $0x4] sm:$0xf]
        %v607 = vld [vmem:[%s604 + $0x8] sm:$0xf]
        %v608 = vld [vmem:[%s604 + $0xc] sm:$0xf]
        %s609 = scalar_lea.vmem %s6, %s39
        %v610 = vld [vmem:[%s609] sm:$0x1]
        %s611 = smul.addr %s586, 4
        %s612 = scalar_lea.vmem [#allocation13], %s611
        %v613 = vld [vmem:[%s612] sm:$0xf]
        %v614 = vld [vmem:[%s612 + $0x4] sm:$0xf]
        %v615 = vld [vmem:[%s612 + $0x8] sm:$0xf]
        %v616 = vld [vmem:[%s612 + $0xc] sm:$0xf]
        %s617 = scalar_lea.vmem %s8, %s39
        %v618 = vld [vmem:[%s617] sm:$0x1]
        %s619 = scalar_lea.vmem %s9, %s39
        %v620 = vld [vmem:[%s619] sm:$0x1]
        %s621 = scalar_lea.vmem [#allocation15], %s39
        %v622 = vld [vmem:[%s621] sm:$0x1]
        %p623 = scmp.eq.s32.totalorder %s39, 0
        // Predicated region
        $region105: #{tpu_custom_call.1} parent=71 // pred_check
          %p624 = pneg %p623
        $region106: #{tpu_custom_call.1} parent=71 // pred_check_branch
          %626 = sbr.rel (%p624) target = $region108
        $region107: #{tpu_custom_call.1} parent=71 // pred_region
          %v627 = vld [vmem:[%s507] sm:$0xf]
          %v628 = vunpack.c.l.bf16 %v627
          %vm629 = vcmask 261120
          %630 = vst.msk [vmem:[#allocation2] sm:$0xff] %vm629, %v628
        $region108: #{tpu_custom_call.1} parent=71 // pred_fallthru
          _
        %v631 = vld [vmem:[#allocation2] sm:$0xff]
        %v632 = vpack.c.bf16 %v631, %v631
        %v637 = vunpack.c.l.b16 %v589
        %v638 = vunpack.c.l.b16 %v590
        %v639 = vunpack.c.l.b16 %v591
        %v640 = vunpack.c.l.b16 %v592
        %v641 = vpack.c.b16 %v638, %v637
        %v642 = vpack.c.b16 %v640, %v639
        %vm645 = vcmask 261120
        %v647 = vsel %vm645, %v632, 0
        %649 = vmatpush.bf16.msra.mxu0 0
        %650 = vmatpush.bf16.msra.mxu0 0
        %651 = vmatpush.bf16.msra.mxu0 0
        %652 = vmatpush.bf16.msra.mxu0 0
        %653 = vmatpush.bf16.msra.mxu0 0
        %654 = vmatpush.bf16.msra.mxu0 0
        %655 = vmatpush.bf16.msra.mxu0 %v642
        %656 = vmatpush.bf16.msra.mxu0 %v641
        %657 = vmatmul.bf16.gmra.mxu0 %v647
        %v658 = vpop.f32.mrf.mxu0
        %v659 = vadd.f32 0.0, %v658
        %v660 = vpop.f32.mrf.mxu0
        %661 = vdwg.mxu0
        %v662 = vpack.c.bf16 %v659, %v659
        %v664 = vunpack.c.l.b16 %v662
        %v665 = vpack.c.b16 %v664, %v664
        %666 = vrot.lane.b32.xlu0 %v665, 96
        %v667 = vpop.permute.xlu0 %666
        %vm668 = vcmask 130048
        %v670 = vsel %vm668, %v662, 0
        %v673 = vsel %vm668, %v667, 0
        %675 = vmatpush.bf16.xpose.msra.mxu0 0
        %676 = vmatpush.bf16.xpose.msra.mxu0 0
        %677 = vmatpush.bf16.xpose.msra.mxu0 0
        %678 = vmatpush.bf16.xpose.msra.mxu0 0
        %679 = vmatpush.bf16.xpose.msra.mxu0 0
        %680 = vmatpush.bf16.xpose.msra.mxu0 0
        %681 = vmatpush.bf16.xpose.msra.mxu0 0
        %682 = vmatpush.bf16.xpose.msra.mxu0 %v673
        %683 = vmatmul.bf16.gmra.mxu0 %v670
        %v684 = vpop.f32.mrf.mxu0
        %v685 = vadd.f32 0.0, %v684
        %v686 = vpop.f32.mrf.mxu0
        %687 = vdwg.mxu0
        %v688 = vmul.f32 %v685, 0.25
        %vm689 = vcmask 64512
        %v690 = vsel %vm689, %v688, -inf
        %691 = vmax.xlane.f32.xlu0 %v690
        %v692 = vpop.xlane.xlu0 %691
        %v693 = vsub.f32 %v688, %v692
        %v694 = vmul.f32 %v693, 1.442695
        %v695 = vpow.pop %v694
        %v696 = vsel %vm689, %v695, 0.0
        %697 = vadd.xlane.f32.xlu0 %v696
        %v698 = vpop.xlane.xlu0 %697
        %v699 = vrcp.pop %v698
        %v700 = vmul.f32 %v695, %v699
        %v701 = vpack.c.bf16 %v700, %v700
        %702 = vrot.lane.b32.xlu0 %v665, 64
        %v703 = vpop.permute.xlu0 %702
        %v705 = vsel %vm689, %v701, 0
        %vm707 = vcmask 1043456
        %v709 = vsel %vm707, %v703, 0
        %711 = vmatpush.bf16.msra.mxu0 0
        %712 = vmatpush.bf16.msra.mxu0 0
        %713 = vmatpush.bf16.msra.mxu0 0
        %714 = vmatpush.bf16.msra.mxu0 0
        %715 = vmatpush.bf16.msra.mxu0 0
        %716 = vmatpush.bf16.msra.mxu0 0
        %717 = vmatpush.bf16.msra.mxu0 0
        %718 = vmatpush.bf16.msra.mxu0 %v709
        %719 = vmatmul.bf16.gmra.mxu0 %v705
        %v720 = vpop.f32.mrf.mxu0
        %v721 = vadd.f32 0.0, %v720
        %v722 = vpop.f32.mrf.mxu0
        %723 = vdwg.mxu0
        %724 = vst.msk [vmem:[#allocation3] sm:$0xff] %vm668, %v721
        %725 = vrot.lane.b32.xlu0 %v665, 112
        %v726 = vpop.permute.xlu0 %725
        %727 = vrot.lane.b32.xlu0 %v665, 80
        %v728 = vpop.permute.xlu0 %727
        %v730 = vsel %vm668, %v726, 0
        %v733 = vsel %vm668, %v728, 0
        %735 = vmatpush.bf16.xpose.msra.mxu0 0
        %736 = vmatpush.bf16.xpose.msra.mxu0 0
        %737 = vmatpush.bf16.xpose.msra.mxu0 0
        %738 = vmatpush.bf16.xpose.msra.mxu0 0
        %739 = vmatpush.bf16.xpose.msra.mxu0 0
        %740 = vmatpush.bf16.xpose.msra.mxu0 0
        %741 = vmatpush.bf16.xpose.msra.mxu0 0
        %742 = vmatpush.bf16.xpose.msra.mxu0 %v733
        %743 = vmatmul.bf16.gmra.mxu0 %v730
        %v744 = vpop.f32.mrf.mxu0
        %v745 = vadd.f32 0.0, %v744
        %v746 = vpop.f32.mrf.mxu0
        %747 = vdwg.mxu0
        %v748 = vmul.f32 %v745, 0.25
        %v749 = vsel %vm689, %v748, -inf
        %750 = vmax.xlane.f32.xlu0 %v749
        %v751 = vpop.xlane.xlu0 %750
        %v752 = vsub.f32 %v748, %v751
        %v753 = vmul.f32 %v752, 1.442695
        %v754 = vpow.pop %v753
        %v755 = vsel %vm689, %v754, 0.0
        %756 = vadd.xlane.f32.xlu0 %v755
        %v757 = vpop.xlane.xlu0 %756
        %v758 = vrcp.pop %v757
        %v759 = vmul.f32 %v754, %v758
        %v760 = vpack.c.bf16 %v759, %v759
        %761 = vrot.lane.b32.xlu0 %v665, 48
        %v762 = vpop.permute.xlu0 %761
        %v764 = vsel %vm689, %v760, 0
        %v767 = vsel %vm707, %v762, 0
        %769 = vmatpush.bf16.msra.mxu0 0
        %770 = vmatpush.bf16.msra.mxu0 0
        %771 = vmatpush.bf16.msra.mxu0 0
        %772 = vmatpush.bf16.msra.mxu0 0
        %773 = vmatpush.bf16.msra.mxu0 0
        %774 = vmatpush.bf16.msra.mxu0 0
        %775 = vmatpush.bf16.msra.mxu0 0
        %776 = vmatpush.bf16.msra.mxu0 %v767
        %777 = vmatmul.bf16.gmra.mxu0 %v764
        %v778 = vpop.f32.mrf.mxu0
        %v779 = vadd.f32 0.0, %v778
        %v780 = vpop.f32.mrf.mxu0
        %781 = vdwg.mxu0
        %783 = vrot.lane.b32.xlu0 %v779, 16
        %v784 = vpop.permute.xlu0 %783
        %vm786 = vcmask 261248
        %787 = vst.msk [vmem:[#allocation3] sm:$0xff] %vm786, %v784
        %v788 = vld [vmem:[#allocation3] sm:$0xff]
        %v789 = vpack.c.bf16 %v788, %v788
        %v794 = vunpack.c.l.b16 %v595
        %v795 = vunpack.c.l.b16 %v596
        %v796 = vunpack.c.l.b16 %v597
        %v797 = vunpack.c.l.b16 %v598
        %v798 = vpack.c.b16 %v795, %v794
        %v799 = vpack.c.b16 %v797, %v796
        %v803 = vsel %vm645, %v789, 0
        %805 = vmatpush.bf16.msra.mxu0 0
        %806 = vmatpush.bf16.msra.mxu0 0
        %807 = vmatpush.bf16.msra.mxu0 0
        %808 = vmatpush.bf16.msra.mxu0 0
        %809 = vmatpush.bf16.msra.mxu0 0
        %810 = vmatpush.bf16.msra.mxu0 0
        %811 = vmatpush.bf16.msra.mxu0 %v799
        %812 = vmatpush.bf16.msra.mxu0 %v798
        %813 = vmatmul.bf16.gmra.mxu0 %v803
        %v814 = vpop.f32.mrf.mxu0
        %v815 = vadd.f32 %v631, %v814
        %v816 = vpop.f32.mrf.mxu0
        %817 = vdwg.mxu0
        %v818 = vsel %vm645, %v815, 0.0
        %819 = vadd.xlane.f32.xlu0 %v818
        %v820 = vpop.xlane.xlu0 %819
        %v821 = vrcp.pop 32.0
        %v822 = vmul.f32 32.0, %v821
        %v823 = vsub.f32 1.0, %v822
        %v824 = vmul.f32 %v821, %v823
        %v825 = vadd.f32 %v821, %v824
        %vm826 = vweird.f32 %v821
        %v827 = vsel %vm826, %v821, %v825
        %v828 = vmul.f32 %v820, %v827
        %v829 = vsub.f32 %v815, %v828
        %v830 = vmul.f32 %v829, %v829
        %v831 = vsel %vm645, %v830, 0.0
        %832 = vadd.xlane.f32.xlu0 %v831
        %v833 = vpop.xlane.xlu0 %832
        %v834 = vmul.f32 %v833, %v827
        %v835 = vadd.f32 %v834, 1e-05
        %v836 = vrsqrt.pop %v835
        %v837 = vmul.f32 %v836, %v835
        %v838 = vmul.f32 %v837, %v836
        %v839 = vmul.f32 0.5, %v838
        %v840 = vsub.f32 1.5, %v839
        %v841 = vmul.f32 %v836, %v840
        %vm842 = vweird.f32 %v835
        %vm843 = vweird.f32 %v836
        %vm844 = vmor %vm842, %vm843
        %v845 = vsel %vm844, %v836, %v841
        %v846 = vmul.f32 %v829, %v845
        %v848 = vperm.slane %v600, 0
        %v850 = vmul.f32 %v846, %v848
        %v852 = vperm.slane %v602, 0
        %v854 = vadd.f32 %v850, %v852
        %v855 = vpack.c.bf16 %v854, %v854
        %v857 = vperm.slane %v610, 0
        %v863 = vunpack.c.l.b16 %v605
        %v864 = vunpack.c.l.b16 %v606
        %v865 = vunpack.c.l.b16 %v607
        %v866 = vunpack.c.l.b16 %v608
        %v867 = vpack.c.b16 %v864, %v863
        %v868 = vpack.c.b16 %v866, %v865
        %v872 = vsel %vm645, %v855, 0
        %874 = vmatpush.bf16.msra.mxu0 0
        %875 = vmatpush.bf16.msra.mxu0 0
        %876 = vmatpush.bf16.msra.mxu0 0
        %877 = vmatpush.bf16.msra.mxu0 0
        %878 = vmatpush.bf16.msra.mxu0 0
        %879 = vmatpush.bf16.msra.mxu0 0
        %880 = vmatpush.bf16.msra.mxu0 %v868
        %881 = vmatpush.bf16.msra.mxu0 %v867
        %882 = vmatmul.bf16.gmra.mxu0 %v872
        %v883 = vpop.f32.mrf.mxu0
        %v884 = vadd.f32 %v857, %v883
        %v885 = vpop.f32.mrf.mxu0
        %886 = vdwg.mxu0
        %v887 = vmax.f32 %v884, 0.0
        %v888 = vpack.c.bf16 %v887, %v887
        %v890 = vperm.slane %v618, 0
        %v896 = vunpack.c.l.b16 %v613
        %v897 = vunpack.c.l.b16 %v614
        %v898 = vunpack.c.l.b16 %v615
        %v899 = vunpack.c.l.b16 %v616
        %v900 = vpack.c.b16 %v897, %v896
        %v901 = vpack.c.b16 %v899, %v898
        %v905 = vsel %vm645, %v888, 0
        %907 = vmatpush.bf16.msra.mxu0 0
        %908 = vmatpush.bf16.msra.mxu0 0
        %909 = vmatpush.bf16.msra.mxu0 0
        %910 = vmatpush.bf16.msra.mxu0 0
        %911 = vmatpush.bf16.msra.mxu0 0
        %912 = vmatpush.bf16.msra.mxu0 0
        %913 = vmatpush.bf16.msra.mxu0 %v901
        %914 = vmatpush.bf16.msra.mxu0 %v900
        %915 = vmatmul.bf16.gmra.mxu0 %v905
        %v916 = vpop.f32.mrf.mxu0
        %v917 = vadd.f32 %v890, %v916
        %v918 = vpop.f32.mrf.mxu0
        %919 = vdwg.mxu0
        %v920 = vadd.f32 %v917, %v854
        %v921 = vsel %vm645, %v920, 0.0
        %922 = vadd.xlane.f32.xlu0 %v921
        %v923 = vpop.xlane.xlu0 %922
        %v924 = vmul.f32 %v923, %v827
        %v925 = vsub.f32 %v920, %v924
        %v926 = vmul.f32 %v925, %v925
        %v927 = vsel %vm645, %v926, 0.0
        %928 = vadd.xlane.f32.xlu0 %v927
        %v929 = vpop.xlane.xlu0 %928
        %v930 = vmul.f32 %v929, %v827
        %v931 = vadd.f32 %v930, 1e-05
        %v932 = vrsqrt.pop %v931
        %v933 = vmul.f32 %v932, %v931
        %v934 = vmul.f32 %v933, %v932
        %v935 = vmul.f32 0.5, %v934
        %v936 = vsub.f32 1.5, %v935
        %v937 = vmul.f32 %v932, %v936
        %vm938 = vweird.f32 %v931
        %vm939 = vweird.f32 %v932
        %vm940 = vmor %vm938, %vm939
        %v941 = vsel %vm940, %v932, %v937
        %v942 = vmul.f32 %v925, %v941
        %v944 = vperm.slane %v620, 0
        %v946 = vmul.f32 %v942, %v944
        %v948 = vperm.slane %v622, 0
        %v950 = vadd.f32 %v946, %v948
        %951 = vst.msk [vmem:[#allocation2] sm:$0xff] %vm645, %v950
        %p952 = scmp.eq.s32.totalorder %s39, 1
        // Predicated region
        $region109: #{tpu_custom_call.1} parent=71 // pred_check
          %p953 = pneg %p952
        $region110: #{tpu_custom_call.1} parent=71 // pred_check_branch
          %955 = sbr.rel (%p953) target = $region112
        $region111: #{tpu_custom_call.1} parent=71 // pred_region
          %v956 = vsel %vm645, %v950, 0.0
          %v957 = vrot.slane %v956, 4
          %v958 = vadd.f32 %v956, %v957
          %v959 = vrot.slane %v958, 2
          %v960 = vadd.f32 %v958, %v959
          %v961 = vrot.slane %v960, 1
          %v962 = vadd.f32 %v960, %v961
          %v963 = vrcp.pop 8.0
          %v964 = vmul.f32 8.0, %v963
          %v965 = vsub.f32 1.0, %v964
          %v966 = vmul.f32 %v963, %v965
          %v967 = vadd.f32 %v963, %v966
          %vm968 = vweird.f32 %v963
          %v969 = vsel %vm968, %v963, %v967
          %v970 = vmul.f32 %v962, %v969
          %v971 = vpack.c.bf16 %v970, %v970
          %v972 = vld [vmem:[#allocation16] sm:$0xf]
          %v973 = vld [vmem:[#allocation16 + $0x4] sm:$0xf]
          %v974 = vld [vmem:[#allocation16 + $0x8] sm:$0xf]
          %v975 = vld [vmem:[#allocation16 + $0xc] sm:$0xf]
          %v976 = vld [vmem:[%s12] sm:$0x1]
          %v981 = vunpack.c.l.b16 %v972
          %v982 = vunpack.c.l.b16 %v973
          %v983 = vunpack.c.l.b16 %v974
          %v984 = vunpack.c.l.b16 %v975
          %v985 = vpack.c.b16 %v982, %v981
          %v986 = vpack.c.b16 %v984, %v983
          %v990 = vsel %vm645, %v971, 0
          %992 = vmatpush.bf16.msra.mxu0 0
          %993 = vmatpush.bf16.msra.mxu0 0
          %994 = vmatpush.bf16.msra.mxu0 0
          %995 = vmatpush.bf16.msra.mxu0 0
          %996 = vmatpush.bf16.msra.mxu0 0
          %997 = vmatpush.bf16.msra.mxu0 0
          %998 = vmatpush.bf16.msra.mxu0 %v986
          %999 = vmatpush.bf16.msra.mxu0 %v985
          %1000 = vmatmul.bf16.gmra.mxu0 %v990
          %v1001 = vpop.f32.mrf.mxu0
          %v1002 = vadd.f32 %v976, %v1001
          %v1003 = vpop.f32.mrf.mxu0
          %1004 = vdwg.mxu0
          %1005 = vst [vmem:[%s584] sm:$0x1] %v1002
        $region112: #{tpu_custom_call.1} parent=71 // pred_fallthru
          _
        %s1006 = sand.u32 %s332, 1
        %s1007 = scalar_lea.sflag [#allocation6], %s1006
        %s1008 = sand.u32 %s332, 1
        %s1009 = scalar_lea.vmem [#allocation18], %s1008
        // Predicated region
        $region113: #{tpu_custom_call.1} parent=71 // pred_check
          %p1010 = pneg %p342
        $region114: #{tpu_custom_call.1} parent=71 // pred_check_branch
          %1012 = sbr.rel (%p1010) target = $region116
        $region115: #{tpu_custom_call.1} parent=71 // pred_region
          %1014 = vsyncadd %s1007, 0
          %s1015 = scalar_lea.hbm %s13, %s38
          %s1017 = sshll.u32 %s1009, 4
          %s1018 = int_to_ptr.vmem [resolvable:$true] %s1017
          %s1019 = sshll.u32 %s1015, 4
          %s1020 = int_to_ptr.hbm [resolvable:$true] %s1019
          %1022 = dma.vmem_to_hbm [thread:$0]  %s1018, 16, %s1020, %s1007
        $region116: #{tpu_custom_call.1} parent=71 // pred_fallthru
          _
      $region72: #{tpu_custom_call.1} parent=5 // pred_fallthru
        _
      %p1023 = scmp.le.s32.totalorder 2, %s29
      // Predicated region
      $region117: #{tpu_custom_call.1} parent=5 // pred_check
        %p1024 = pneg %p1023
      $region118: #{tpu_custom_call.1} parent=5 // pred_check_branch
        %1026 = sbr.rel (%p1024) target = $region120
      $region119: #{tpu_custom_call.1} parent=5 // pred_region
        %s1027 = ssub.s32 %s29, 2
        // Predicated region
        $region121: #{tpu_custom_call.1} parent=119 // pred_check
          %p1028 = pneg %p348
        $region122: #{tpu_custom_call.1} parent=119 // pred_check_branch
          %1030 = sbr.rel (%p1028) target = $region124
        $region123: #{tpu_custom_call.1} parent=119 // pred_region
          %s1031 = sand.u32 %s333, 1
          %s1032 = scalar_lea.sflag [#allocation6], %s1031
          %s1033 = sand.u32 %s333, 1
          %s1034 = scalar_lea.vmem [#allocation18], %s1033
          %1036 = dma.done %s1032, 16
        $region124: #{tpu_custom_call.1} parent=119 // pred_fallthru
          _
      $region120: #{tpu_custom_call.1} parent=5 // pred_fallthru
        _
    $region6: #{tpu_custom_call.1} parent=1 // loop_footer
      %s33 = sadd.s32 1, %s29
    $region7: #{tpu_custom_call.1} parent=1 // loop_footer_branch
      %28 = sbr.rel target = $region3
    $region8: #{tpu_custom_call.1} parent=1 // loop_exit
      _
    %1037 = vsyncpa [#allocation5], 1
    %s1038 = scalar_lea.sflag [#allocation5], 1
    %1039 = vsyncpa %s1038, 1
    %1040 = vsyncpa [#allocation8], 1
    %1041 = vsyncpa [#allocation11], 1
    %1042 = vsyncpa [#allocation14], 1
    %1043 = vsyncpa [#allocation17], 1
    %1044 = vsyncpa [#allocation6], 1
    %s1045 = scalar_lea.sflag [#allocation6], 1
    %1046 = vsyncpa %s1045, 1

</llo_original>
